<compile_context>
chip_gen: v7x
topology: tpu7x:2x2x1
jax: 0.10.0
libtpu: 0.0.40
codegen_flags: <defaults>
</compile_context>

<pallas_src>
import functools
import math

import jax
import jax.numpy as jnp
from jax.experimental import pallas as pl
from jax.experimental.pallas import tpu as pltpu


# -----------------------------------------------------------------------------
# Pallas kernel: fused multi-head scaled dot-product attention core
# -----------------------------------------------------------------------------
def _mha_sdp_kernel(*refs, scale, n_heads, d_k, d_v, has_prev):
    if has_prev:
        q_ref, k_ref, v_ref, prev_ref, out_ref, scores_ref = refs
    else:
        q_ref, k_ref, v_ref, out_ref, scores_ref = refs
        prev_ref = None

    # Fold the softmax scale into q (TL*H*d_k elements instead of H*TL*S scores).
    q = q_ref[0, :, :] * scale      # (TL, H*d_k)  native dtype
    k = k_ref[0, :, :]              # (S,  H*d_k)
    v = v_ref[0, :, :]              # (S,  H*d_v)

    out_parts = []
    for h in range(n_heads):
        qh = q[:, h * d_k:(h + 1) * d_k]       # (TL, d_k)
        kh = k[:, h * d_k:(h + 1) * d_k]       # (S,  d_k)
        vh = v[:, h * d_v:(h + 1) * d_v]       # (S,  d_v)

        # attn_scores = (q*scale) @ k^T (+ prev); f32 MXU accumulation (NT matmul).
        s = jax.lax.dot_general(qh, kh, (((1,), (1,)), ((), ())),
                                preferred_element_type=jnp.float32)
        if prev_ref is not None:
            s = s + prev_ref[0, h, :, :].astype(jnp.float32)

        scores_ref[0, h, :, :] = s.astype(scores_ref.dtype)

        # Numerically-stable softmax in f32; EUP reciprocal + one Newton step.
        m = jnp.max(s, axis=-1, keepdims=True)
        e = jnp.exp(s - m)
        denom = jnp.sum(e, axis=-1, keepdims=True)
        r = pl.reciprocal(denom, approx=True)
        r = r * (2.0 - denom * r)               # Newton refinement -> near-exact
        w = e * r

        # TODO(synk): attention dropout (attn_dp) omitted — module default rate is 0.0.

        o = jnp.dot(w.astype(vh.dtype), vh, preferred_element_type=jnp.float32)
        out_parts.append(o.astype(out_ref.dtype))

    out_ref[0, :, :] = jnp.concatenate(out_parts, axis=-1)   # (TL, H*d_v)


# -----------------------------------------------------------------------------
# Wrapper: tiling / VMEM budgeting / pallas_call
# -----------------------------------------------------------------------------
def _round_up(x, m):
    return ((x + m - 1) // m) * m


def _vmem_limit_bytes():
    cap = None
    try:
        info = pltpu.get_tpu_info()
        cap = getattr(info, "vmem_capacity_bytes", None)
    except Exception:
        cap = None
    if not cap:
        cap = 64 * 1024 * 1024          # conservative default: v7x per-TensorCore VMEM
    # <= 48 MiB on 128 MiB parts (v5e/v6e); ~40 MiB on v7x's 64 MiB/TC.
    return int(min(48 * 1024 * 1024, (int(cap) * 5) // 8))


def _select_l_tile(L, S, H, d_k, d_v, in_itemsize, scores_itemsize,
                   has_prev, prev_itemsize, budget_bytes):
    """Largest multiple-of-8 L tile whose double-buffered pipeline blocks
    (q, k, v, out, scores, prev) plus in-kernel f32 temporaries fit the budget."""
    def usage(tl):
        dbuf = 2 * in_itemsize * (tl * H * d_k + S * H * d_k + S * H * d_v
                                  + tl * H * d_v)
        dbuf += 2 * scores_itemsize * H * tl * S
        if has_prev:
            dbuf += 2 * prev_itemsize * H * tl * S
        temps = 4 * tl * S * 4 + 4 * tl * H * d_v     # f32 working set in the body
        return dbuf + temps

    l_cap = _round_up(L, 8)
    tl = 8
    for cand in (8, 16, 32, 64, 128, 256, 512, 1024):
        if cand > l_cap:
            break
        if usage(cand) <= budget_bytes:
            tl = cand
    return tl


def scaled_dot_product_packed(q, k, v, prev=None, *, n_heads, d_k, d_v, d_model,
                              scores_dtype=None, interpret=False):
    """Fused multi-head scaled dot-product attention.

    q: [B, L, H*d_k], k: [B, S, H*d_k], v: [B, S, H*d_v]   (projection layout,
    no head transposes needed), prev: optional [B, H, L, S].

    Returns (out [B, L, H*d_v], attn_scores [B, H, L, S]).
    """
    B, L, _ = q.shape
    S = k.shape[1]
    H = n_heads
    assert q.shape == (B, L, H * d_k)
    assert k.shape == (B, S, H * d_k)
    assert v.shape == (B, S, H * d_v)

    head_dim = d_model // n_heads
    scale = head_dim ** (-0.5)

    scores_dtype = q.dtype if scores_dtype is None else jnp.dtype(scores_dtype)
    has_prev = prev is not None

    vmem_limit = _vmem_limit_bytes()
    budget = (vmem_limit * 4) // 5
    TL = _select_l_tile(
        L, S, H, d_k, d_v,
        q.dtype.itemsize, jnp.dtype(scores_dtype).itemsize,
        has_prev, (prev.dtype.itemsize if has_prev else 0),
        budget)

    # Pad L to a multiple of the tile (bounded VMEM even for awkward L); padded
    # rows are independent under the row-softmax and sliced off afterwards.
    L_pad = _round_up(L, TL)
    if L_pad != L:
        q = jnp.pad(q, ((0, 0), (0, L_pad - L), (0, 0)))
        if has_prev:
            prev = jnp.pad(prev, ((0, 0), (0, 0), (0, L_pad - L), (0, 0)))

    grid = (B, L_pad // TL)

    in_specs = [
        pl.BlockSpec((1, TL, H * d_k), lambda b, l: (b, l, 0)),
        pl.BlockSpec((1, S, H * d_k), lambda b, l: (b, 0, 0)),   # resident over L
        pl.BlockSpec((1, S, H * d_v), lambda b, l: (b, 0, 0)),   # resident over L
    ]
    inputs = [q, k, v]
    if has_prev:
        in_specs.append(pl.BlockSpec((1, H, TL, S), lambda b, l: (b, 0, l, 0)))
        inputs.append(prev)

    out_specs = [
        pl.BlockSpec((1, TL, H * d_v), lambda b, l: (b, l, 0)),
        pl.BlockSpec((1, H, TL, S), lambda b, l: (b, 0, l, 0)),
    ]
    out_shape = (
        jax.ShapeDtypeStruct((B, L_pad, H * d_v), q.dtype),
        jax.ShapeDtypeStruct((B, H, L_pad, S), scores_dtype),
    )

    bytes_accessed = (
        q.size * q.dtype.itemsize + k.size * k.dtype.itemsize
        + v.size * v.dtype.itemsize
        + (prev.size * prev.dtype.itemsize if has_prev else 0)
        + B * L_pad * H * d_v * q.dtype.itemsize
        + B * H * L_pad * S * jnp.dtype(scores_dtype).itemsize)
    cost = pl.CostEstimate(
        flops=2 * B * H * L_pad * S * (d_k + d_v),
        transcendentals=B * H * L_pad * S,
        bytes_accessed=int(bytes_accessed))

    kernel = functools.partial(_mha_sdp_kernel, scale=scale, n_heads=n_heads,
                               d_k=d_k, d_v=d_v, has_prev=has_prev)

    # Megacore: split batches across TensorCores (keeps the resident K/V DMA
    # un-duplicated); the L axis is sequenced per core.
    dim_sem = ("parallel", "arbitrary") if B >= 2 else ("parallel", "parallel")

    out, scores = pl.pallas_call(
        kernel,
        out_shape=out_shape,
        grid_spec=pltpu.PrefetchScalarGridSpec(
            num_scalar_prefetch=0,
            grid=grid,
            in_specs=in_specs,
            out_specs=out_specs,
        ),
        compiler_params=pltpu.CompilerParams(
            dimension_semantics=dim_sem,
            vmem_limit_bytes=int(vmem_limit),
        ),
        cost_estimate=cost,
        interpret=interpret,
    )(*inputs)

    if L_pad != L:
        out = out[:, :L]
        scores = scores[:, :, :L]
    return out, scores


# -----------------------------------------------------------------------------
# TSTEncoder forward (dense glue in plain JAX; attention core via Pallas kernel).
# All dropouts default to 0.0 in the module -> identity.
# -----------------------------------------------------------------------------
def _layer_norm(x, gamma, beta, eps=1e-5):
    mu = jnp.mean(x, axis=-1, keepdims=True)
    var = jnp.mean(jnp.square(x - mu), axis=-1, keepdims=True)
    return (x - mu) * jax.lax.rsqrt(var + eps) * gamma + beta


def _mha_forward(p, x, prev, *, sdp_fn):
    # Projections stay in [B, L, H*d] layout — no head transposes around the kernel.
    q = x @ p["wq"] + p["bq"]
    k = x @ p["wk"] + p["bk"]
    v = x @ p["wv"] + p["bv"]
    out, scores = sdp_fn(q, k, v, prev)          # out: [B, L, H*d_v]
    out = out @ p["wo"] + p["bo"]
    return out, scores


def _encoder_layer_forward(p, src, prev, *, sdp_fn):
    src, scores = _mha_forward(p, src, prev, sdp_fn=sdp_fn)
    # NOTE: per the PyTorch module there is NO residual before norm_attn.
    src = _layer_norm(src, p["ln1_g"], p["ln1_b"])
    src2 = jax.nn.gelu(src @ p["w1"] + p["b1"], approximate=False) @ p["w2"] + p["b2"]
    src = src + src2
    src = _layer_norm(src, p["ln2_g"], p["ln2_b"])
    return src, scores


def tst_encoder_forward(params, x, *, sdp_fn):
    out, prev = x, None
    for p in params:
        out, prev = _encoder_layer_forward(p, out, prev, sdp_fn=sdp_fn)
    return out


def _init_params(key, n_layers, d_model, n_heads, d_k, d_v, d_ff,
                 dtype=jnp.float32):
    params = []
    for i in range(n_layers):
        keys = jax.random.split(jax.random.fold_in(key, i), 6)

        def lin(kk, fan_in, fan_out):
            return jax.random.normal(kk, (fan_in, fan_out), dtype) / math.sqrt(fan_in)

        params.append(dict(
            wq=lin(keys[0], d_model, n_heads * d_k), bq=jnp.zeros((n_heads * d_k,), dtype),
            wk=lin(keys[1], d_model, n_heads * d_k), bk=jnp.zeros((n_heads * d_k,), dtype),
            wv=lin(keys[2], d_model, n_heads * d_v), bv=jnp.zeros((n_heads * d_v,), dtype),
            wo=lin(keys[3], n_heads * d_v, d_model), bo=jnp.zeros((d_model,), dtype),
            ln1_g=jnp.ones((d_model,), dtype), ln1_b=jnp.zeros((d_model,), dtype),
            w1=lin(keys[4], d_model, d_ff), b1=jnp.zeros((d_ff,), dtype),
            w2=lin(keys[5], d_ff, d_model), b2=jnp.zeros((d_model,), dtype),
            ln2_g=jnp.ones((d_model,), dtype), ln2_b=jnp.zeros((d_model,), dtype),
        ))
    return params


# -----------------------------------------------------------------------------
# Pure-JAX references
# -----------------------------------------------------------------------------
def _sdp_reference_packed(q, k, v, prev, *, d_model, n_heads, d_k, d_v):
    B, L, _ = q.shape
    S = k.shape[1]
    scale = (d_model // n_heads) ** (-0.5)
    qh = q.reshape(B, L, n_heads, d_k).transpose(0, 2, 1, 3)
    kh = k.reshape(B, S, n_heads, d_k).transpose(0, 2, 1, 3)
    vh = v.reshape(B, S, n_heads, d_v).transpose(0, 2, 1, 3)
    scores = jnp.einsum("bhld,bhsd->bhls", qh, kh) * scale
    if prev is not None:
        scores = scores + prev
    w = jax.nn.softmax(scores, axis=-1)
    out = jnp.einsum("bhls,bhsd->bhld", w, vh)
    out = out.transpose(0, 2, 1, 3).reshape(B, L, n_heads * d_v)
    return out, scores


if __name__ == "__main__":
    B, L = 2, 8
    d_model, n_heads, d_ff, n_layers = 32, 4, 64, 2
    d_k = d_v = d_model // n_heads   # 8

    key = jax.random.PRNGKey(0)
    kx, kattn, kparams = jax.random.split(key, 3)

    # --- direct test of the Pallas attention core vs a pure-JAX reference ----
    H, S = n_heads, L
    kq, kk, kv, kprev = jax.random.split(kattn, 4)
    q = jax.random.normal(kq, (B, L, H * d_k), dtype=jnp.float32)
    k = jax.random.normal(kk, (B, S, H * d_k), dtype=jnp.float32)
    v = jax.random.normal(kv, (B, S, H * d_v), dtype=jnp.float32)
    prev = jax.random.normal(kprev, (B, H, L, S), dtype=jnp.float32)

    for p in (prev, None):
        out, scores = scaled_dot_product_packed(
            q, k, v, p, n_heads=n_heads, d_k=d_k, d_v=d_v, d_model=d_model)
        jax.block_until_ready((out, scores))
        out_r, scores_r = _sdp_reference_packed(
            q, k, v, p, d_model=d_model, n_heads=n_heads, d_k=d_k, d_v=d_v)
        assert jnp.allclose(scores, scores_r, atol=1e-4, rtol=1e-4), "scores mismatch"
        assert jnp.allclose(out, out_r, atol=1e-3, rtol=1e-3), "out mismatch"

    # --- full TSTEncoder forward (JAX glue + Pallas attention core) ----------
    x = jax.random.normal(kx, (B, L, d_model), dtype=jnp.float32)
    params = _init_params(kparams, n_layers, d_model, n_heads, d_k, d_v, d_ff)

    sdp_pallas = lambda q_, k_, v_, p_: scaled_dot_product_packed(
        q_, k_, v_, p_, n_heads=n_heads, d_k=d_k, d_v=d_v, d_model=d_model)
    sdp_ref = lambda q_, k_, v_, p_: _sdp_reference_packed(
        q_, k_, v_, p_, d_model=d_model, n_heads=n_heads, d_k=d_k, d_v=d_v)

    y = tst_encoder_forward(params, x, sdp_fn=sdp_pallas)
    jax.block_until_ready(y)
    y_ref = tst_encoder_forward(params, x, sdp_fn=sdp_ref)
    assert y.shape == (B, L, d_model)
    assert jnp.allclose(y, y_ref, atol=1e-2, rtol=1e-2), "encoder output mismatch"

    print("KERNEL_OK")
</pallas_src>

<mosaic_0001>
module attributes {stable_mosaic.version = 11 : i64} {
  func.func @_mha_sdp_kernel(%arg0: i32, %arg1: i32, %arg2: memref<1x8x32xf32, #tpu.memory_space<vmem>>, %arg3: memref<1x8x32xf32, #tpu.memory_space<vmem>>, %arg4: memref<1x8x32xf32, #tpu.memory_space<vmem>>, %arg5: memref<1x4x8x8xf32, #tpu.memory_space<vmem>>, %arg6: memref<1x8x32xf32, #tpu.memory_space<vmem>>, %arg7: memref<1x4x8x8xf32, #tpu.memory_space<vmem>>) attributes {dimension_semantics = [#tpu.dimension_semantics<parallel>, #tpu.dimension_semantics<arbitrary>], iteration_bounds = array<i64: 2, 1>, scalar_prefetch = 0 : i64, scratch_operands = 0 : i64, tpu.core_type = #tpu.core_type<tc>, window_params = [{transform_indices = @transform_0, window_bounds = array<i64: 1, 8, 32>}, {transform_indices = @transform_1, window_bounds = array<i64: 1, 8, 32>}, {transform_indices = @transform_2, window_bounds = array<i64: 1, 8, 32>}, {transform_indices = @transform_3, window_bounds = array<i64: 1, 4, 8, 8>}, {transform_indices = @transform_4, window_bounds = array<i64: 1, 8, 32>}, {transform_indices = @transform_5, window_bounds = array<i64: 1, 4, 8, 8>}]} {
    %c0 = arith.constant 0 : index
    %c0_0 = arith.constant 0 : index
    %c0_1 = arith.constant 0 : index
    %0 = vector.load %arg2[%c0, %c0_0, %c0_1] : memref<1x8x32xf32, #tpu.memory_space<vmem>>, vector<1x8x32xf32>
    %1 = vector.shape_cast %0 : vector<1x8x32xf32> to vector<8x32xf32>
    %cst = arith.constant 0.353553385 : f32
    %2 = vector.broadcast %cst : f32 to vector<8x32xf32>
    %3 = arith.mulf %1, %2 : vector<8x32xf32>
    %c0_2 = arith.constant 0 : index
    %c0_3 = arith.constant 0 : index
    %c0_4 = arith.constant 0 : index
    %4 = vector.load %arg3[%c0_2, %c0_3, %c0_4] : memref<1x8x32xf32, #tpu.memory_space<vmem>>, vector<1x8x32xf32>
    %5 = vector.shape_cast %4 : vector<1x8x32xf32> to vector<8x32xf32>
    %c0_5 = arith.constant 0 : index
    %c0_6 = arith.constant 0 : index
    %c0_7 = arith.constant 0 : index
    %6 = vector.load %arg4[%c0_5, %c0_6, %c0_7] : memref<1x8x32xf32, #tpu.memory_space<vmem>>, vector<1x8x32xf32>
    %7 = vector.shape_cast %6 : vector<1x8x32xf32> to vector<8x32xf32>
    %8 = vector.extract_strided_slice %3 {offsets = [0, 0], sizes = [8, 8], strides = [1, 1]} : vector<8x32xf32> to vector<8x8xf32>
    %9 = vector.extract_strided_slice %5 {offsets = [0, 0], sizes = [8, 8], strides = [1, 1]} : vector<8x32xf32> to vector<8x8xf32>
    %10 = vector.extract_strided_slice %7 {offsets = [0, 0], sizes = [8, 8], strides = [1, 1]} : vector<8x32xf32> to vector<8x8xf32>
    %cst_8 = arith.constant dense<0.000000e+00> : vector<8x8xf32>
    %11 = tpu.matmul %8, %9, %cst_8 {dimension_numbers = #tpu.dot_dimension_numbers<[1], [1], [0], [0], [0, 0, 1, 0], [], []>} : vector<8x8xf32>, vector<8x8xf32>, vector<8x8xf32> -> vector<8x8xf32>
    %c0_9 = arith.constant 0 : index
    %c0_10 = arith.constant 0 : index
    %c0_11 = arith.constant 0 : index
    %c0_12 = arith.constant 0 : index
    %12 = vector.load %arg5[%c0_9, %c0_10, %c0_11, %c0_12] : memref<1x4x8x8xf32, #tpu.memory_space<vmem>>, vector<1x1x8x8xf32>
    %13 = vector.shape_cast %12 : vector<1x1x8x8xf32> to vector<8x8xf32>
    %14 = arith.addf %11, %13 : vector<8x8xf32>
    %c0_13 = arith.constant 0 : index
    %c0_14 = arith.constant 0 : index
    %c0_15 = arith.constant 0 : index
    %c0_16 = arith.constant 0 : index
    %15 = vector.load %arg7[%c0_13, %c0_14, %c0_15, %c0_16] : memref<1x4x8x8xf32, #tpu.memory_space<vmem>>, vector<1x1x8x8xf32>
    %16 = vector.shape_cast %15 : vector<1x1x8x8xf32> to vector<8x8xf32>
    %17 = vector.shape_cast %14 : vector<8x8xf32> to vector<1x1x8x8xf32>
    tpu.vector_store %arg7[%c0_13, %c0_14, %c0_15, %c0_16], %17 {strides = array<i32>} : memref<1x4x8x8xf32, #tpu.memory_space<vmem>>, vector<1x1x8x8xf32>,
    %cst_17 = arith.constant dense<0xFF800000> : vector<8xf32>
    %18 = vector.multi_reduction <maximumf>, %14, %cst_17 [1] : vector<8x8xf32> to vector<8xf32>
    %19 = vector.shape_cast %18 : vector<8xf32> to vector<8x1xf32>
    %20 = vector.broadcast %19 : vector<8x1xf32> to vector<8x8xf32>
    %21 = arith.subf %14, %20 : vector<8x8xf32>
    %22 = math.exp %21 : vector<8x8xf32>
    %cst_18 = arith.constant dense<0.000000e+00> : vector<8xf32>
    %23 = vector.multi_reduction <add>, %22, %cst_18 [1] : vector<8x8xf32> to vector<8xf32>
    %24 = vector.shape_cast %23 : vector<8xf32> to vector<8x1xf32>
    %25 = tpu.reciprocal %24 {approx = true} : vector<8x1xf32> -> vector<8x1xf32>
    %26 = arith.mulf %24, %25 : vector<8x1xf32>
    %cst_19 = arith.constant 2.000000e+00 : f32
    %27 = vector.broadcast %cst_19 : f32 to vector<8x1xf32>
    %28 = arith.subf %27, %26 : vector<8x1xf32>
    %29 = arith.mulf %25, %28 : vector<8x1xf32>
    %30 = vector.broadcast %29 : vector<8x1xf32> to vector<8x8xf32>
    %31 = arith.mulf %22, %30 : vector<8x8xf32>
    %cst_20 = arith.constant dense<0.000000e+00> : vector<8x8xf32>
    %32 = tpu.matmul %31, %10, %cst_20 {dimension_numbers = #tpu.dot_dimension_numbers<[1], [0], [0], [1], [0, 0, 1, 1], [], []>} : vector<8x8xf32>, vector<8x8xf32>, vector<8x8xf32> -> vector<8x8xf32>
    %33 = vector.extract_strided_slice %3 {offsets = [0, 8], sizes = [8, 8], strides = [1, 1]} : vector<8x32xf32> to vector<8x8xf32>
    %34 = vector.extract_strided_slice %5 {offsets = [0, 8], sizes = [8, 8], strides = [1, 1]} : vector<8x32xf32> to vector<8x8xf32>
    %35 = vector.extract_strided_slice %7 {offsets = [0, 8], sizes = [8, 8], strides = [1, 1]} : vector<8x32xf32> to vector<8x8xf32>
    %cst_21 = arith.constant dense<0.000000e+00> : vector<8x8xf32>
    %36 = tpu.matmul %33, %34, %cst_21 {dimension_numbers = #tpu.dot_dimension_numbers<[1], [1], [0], [0], [0, 0, 1, 0], [], []>} : vector<8x8xf32>, vector<8x8xf32>, vector<8x8xf32> -> vector<8x8xf32>
    %c0_22 = arith.constant 0 : index
    %c1 = arith.constant 1 : index
    %c0_23 = arith.constant 0 : index
    %c0_24 = arith.constant 0 : index
    %37 = vector.load %arg5[%c0_22, %c1, %c0_23, %c0_24] : memref<1x4x8x8xf32, #tpu.memory_space<vmem>>, vector<1x1x8x8xf32>
    %38 = vector.shape_cast %37 : vector<1x1x8x8xf32> to vector<8x8xf32>
    %39 = arith.addf %36, %38 : vector<8x8xf32>
    %c0_25 = arith.constant 0 : index
    %c1_26 = arith.constant 1 : index
    %c0_27 = arith.constant 0 : index
    %c0_28 = arith.constant 0 : index
    %40 = vector.load %arg7[%c0_25, %c1_26, %c0_27, %c0_28] : memref<1x4x8x8xf32, #tpu.memory_space<vmem>>, vector<1x1x8x8xf32>
    %41 = vector.shape_cast %40 : vector<1x1x8x8xf32> to vector<8x8xf32>
    %42 = vector.shape_cast %39 : vector<8x8xf32> to vector<1x1x8x8xf32>
    tpu.vector_store %arg7[%c0_25, %c1_26, %c0_27, %c0_28], %42 {strides = array<i32>} : memref<1x4x8x8xf32, #tpu.memory_space<vmem>>, vector<1x1x8x8xf32>,
    %cst_29 = arith.constant dense<0xFF800000> : vector<8xf32>
    %43 = vector.multi_reduction <maximumf>, %39, %cst_29 [1] : vector<8x8xf32> to vector<8xf32>
    %44 = vector.shape_cast %43 : vector<8xf32> to vector<8x1xf32>
    %45 = vector.broadcast %44 : vector<8x1xf32> to vector<8x8xf32>
    %46 = arith.subf %39, %45 : vector<8x8xf32>
    %47 = math.exp %46 : vector<8x8xf32>
    %cst_30 = arith.constant dense<0.000000e+00> : vector<8xf32>
    %48 = vector.multi_reduction <add>, %47, %cst_30 [1] : vector<8x8xf32> to vector<8xf32>
    %49 = vector.shape_cast %48 : vector<8xf32> to vector<8x1xf32>
    %50 = tpu.reciprocal %49 {approx = true} : vector<8x1xf32> -> vector<8x1xf32>
    %51 = arith.mulf %49, %50 : vector<8x1xf32>
    %cst_31 = arith.constant 2.000000e+00 : f32
    %52 = vector.broadcast %cst_31 : f32 to vector<8x1xf32>
    %53 = arith.subf %52, %51 : vector<8x1xf32>
    %54 = arith.mulf %50, %53 : vector<8x1xf32>
    %55 = vector.broadcast %54 : vector<8x1xf32> to vector<8x8xf32>
    %56 = arith.mulf %47, %55 : vector<8x8xf32>
    %cst_32 = arith.constant dense<0.000000e+00> : vector<8x8xf32>
    %57 = tpu.matmul %56, %35, %cst_32 {dimension_numbers = #tpu.dot_dimension_numbers<[1], [0], [0], [1], [0, 0, 1, 1], [], []>} : vector<8x8xf32>, vector<8x8xf32>, vector<8x8xf32> -> vector<8x8xf32>
    %58 = vector.extract_strided_slice %3 {offsets = [0, 16], sizes = [8, 8], strides = [1, 1]} : vector<8x32xf32> to vector<8x8xf32>
    %59 = vector.extract_strided_slice %5 {offsets = [0, 16], sizes = [8, 8], strides = [1, 1]} : vector<8x32xf32> to vector<8x8xf32>
    %60 = vector.extract_strided_slice %7 {offsets = [0, 16], sizes = [8, 8], strides = [1, 1]} : vector<8x32xf32> to vector<8x8xf32>
    %cst_33 = arith.constant dense<0.000000e+00> : vector<8x8xf32>
    %61 = tpu.matmul %58, %59, %cst_33 {dimension_numbers = #tpu.dot_dimension_numbers<[1], [1], [0], [0], [0, 0, 1, 0], [], []>} : vector<8x8xf32>, vector<8x8xf32>, vector<8x8xf32> -> vector<8x8xf32>
    %c0_34 = arith.constant 0 : index
    %c2 = arith.constant 2 : index
    %c0_35 = arith.constant 0 : index
    %c0_36 = arith.constant 0 : index
    %62 = vector.load %arg5[%c0_34, %c2, %c0_35, %c0_36] : memref<1x4x8x8xf32, #tpu.memory_space<vmem>>, vector<1x1x8x8xf32>
    %63 = vector.shape_cast %62 : vector<1x1x8x8xf32> to vector<8x8xf32>
    %64 = arith.addf %61, %63 : vector<8x8xf32>
    %c0_37 = arith.constant 0 : index
    %c2_38 = arith.constant 2 : index
    %c0_39 = arith.constant 0 : index
    %c0_40 = arith.constant 0 : index
    %65 = vector.load %arg7[%c0_37, %c2_38, %c0_39, %c0_40] : memref<1x4x8x8xf32, #tpu.memory_space<vmem>>, vector<1x1x8x8xf32>
    %66 = vector.shape_cast %65 : vector<1x1x8x8xf32> to vector<8x8xf32>
    %67 = vector.shape_cast %64 : vector<8x8xf32> to vector<1x1x8x8xf32>
    tpu.vector_store %arg7[%c0_37, %c2_38, %c0_39, %c0_40], %67 {strides = array<i32>} : memref<1x4x8x8xf32, #tpu.memory_space<vmem>>, vector<1x1x8x8xf32>,
    %cst_41 = arith.constant dense<0xFF800000> : vector<8xf32>
    %68 = vector.multi_reduction <maximumf>, %64, %cst_41 [1] : vector<8x8xf32> to vector<8xf32>
    %69 = vector.shape_cast %68 : vector<8xf32> to vector<8x1xf32>
    %70 = vector.broadcast %69 : vector<8x1xf32> to vector<8x8xf32>
    %71 = arith.subf %64, %70 : vector<8x8xf32>
    %72 = math.exp %71 : vector<8x8xf32>
    %cst_42 = arith.constant dense<0.000000e+00> : vector<8xf32>
    %73 = vector.multi_reduction <add>, %72, %cst_42 [1] : vector<8x8xf32> to vector<8xf32>
    %74 = vector.shape_cast %73 : vector<8xf32> to vector<8x1xf32>
    %75 = tpu.reciprocal %74 {approx = true} : vector<8x1xf32> -> vector<8x1xf32>
    %76 = arith.mulf %74, %75 : vector<8x1xf32>
    %cst_43 = arith.constant 2.000000e+00 : f32
    %77 = vector.broadcast %cst_43 : f32 to vector<8x1xf32>
    %78 = arith.subf %77, %76 : vector<8x1xf32>
    %79 = arith.mulf %75, %78 : vector<8x1xf32>
    %80 = vector.broadcast %79 : vector<8x1xf32> to vector<8x8xf32>
    %81 = arith.mulf %72, %80 : vector<8x8xf32>
    %cst_44 = arith.constant dense<0.000000e+00> : vector<8x8xf32>
    %82 = tpu.matmul %81, %60, %cst_44 {dimension_numbers = #tpu.dot_dimension_numbers<[1], [0], [0], [1], [0, 0, 1, 1], [], []>} : vector<8x8xf32>, vector<8x8xf32>, vector<8x8xf32> -> vector<8x8xf32>
    %83 = vector.extract_strided_slice %3 {offsets = [0, 24], sizes = [8, 8], strides = [1, 1]} : vector<8x32xf32> to vector<8x8xf32>
    %84 = vector.extract_strided_slice %5 {offsets = [0, 24], sizes = [8, 8], strides = [1, 1]} : vector<8x32xf32> to vector<8x8xf32>
    %85 = vector.extract_strided_slice %7 {offsets = [0, 24], sizes = [8, 8], strides = [1, 1]} : vector<8x32xf32> to vector<8x8xf32>
    %cst_45 = arith.constant dense<0.000000e+00> : vector<8x8xf32>
    %86 = tpu.matmul %83, %84, %cst_45 {dimension_numbers = #tpu.dot_dimension_numbers<[1], [1], [0], [0], [0, 0, 1, 0], [], []>} : vector<8x8xf32>, vector<8x8xf32>, vector<8x8xf32> -> vector<8x8xf32>
    %c0_46 = arith.constant 0 : index
    %c3 = arith.constant 3 : index
    %c0_47 = arith.constant 0 : index
    %c0_48 = arith.constant 0 : index
    %87 = vector.load %arg5[%c0_46, %c3, %c0_47, %c0_48] : memref<1x4x8x8xf32, #tpu.memory_space<vmem>>, vector<1x1x8x8xf32>
    %88 = vector.shape_cast %87 : vector<1x1x8x8xf32> to vector<8x8xf32>
    %89 = arith.addf %86, %88 : vector<8x8xf32>
    %c0_49 = arith.constant 0 : index
    %c3_50 = arith.constant 3 : index
    %c0_51 = arith.constant 0 : index
    %c0_52 = arith.constant 0 : index
    %90 = vector.load %arg7[%c0_49, %c3_50, %c0_51, %c0_52] : memref<1x4x8x8xf32, #tpu.memory_space<vmem>>, vector<1x1x8x8xf32>
    %91 = vector.shape_cast %90 : vector<1x1x8x8xf32> to vector<8x8xf32>
    %92 = vector.shape_cast %89 : vector<8x8xf32> to vector<1x1x8x8xf32>
    tpu.vector_store %arg7[%c0_49, %c3_50, %c0_51, %c0_52], %92 {strides = array<i32>} : memref<1x4x8x8xf32, #tpu.memory_space<vmem>>, vector<1x1x8x8xf32>,
    %cst_53 = arith.constant dense<0xFF800000> : vector<8xf32>
    %93 = vector.multi_reduction <maximumf>, %89, %cst_53 [1] : vector<8x8xf32> to vector<8xf32>
    %94 = vector.shape_cast %93 : vector<8xf32> to vector<8x1xf32>
    %95 = vector.broadcast %94 : vector<8x1xf32> to vector<8x8xf32>
    %96 = arith.subf %89, %95 : vector<8x8xf32>
    %97 = math.exp %96 : vector<8x8xf32>
    %cst_54 = arith.constant dense<0.000000e+00> : vector<8xf32>
    %98 = vector.multi_reduction <add>, %97, %cst_54 [1] : vector<8x8xf32> to vector<8xf32>
    %99 = vector.shape_cast %98 : vector<8xf32> to vector<8x1xf32>
    %100 = tpu.reciprocal %99 {approx = true} : vector<8x1xf32> -> vector<8x1xf32>
    %101 = arith.mulf %99, %100 : vector<8x1xf32>
    %cst_55 = arith.constant 2.000000e+00 : f32
    %102 = vector.broadcast %cst_55 : f32 to vector<8x1xf32>
    %103 = arith.subf %102, %101 : vector<8x1xf32>
    %104 = arith.mulf %100, %103 : vector<8x1xf32>
    %105 = vector.broadcast %104 : vector<8x1xf32> to vector<8x8xf32>
    %106 = arith.mulf %97, %105 : vector<8x8xf32>
    %cst_56 = arith.constant dense<0.000000e+00> : vector<8x8xf32>
    %107 = tpu.matmul %106, %85, %cst_56 {dimension_numbers = #tpu.dot_dimension_numbers<[1], [0], [0], [1], [0, 0, 1, 1], [], []>} : vector<8x8xf32>, vector<8x8xf32>, vector<8x8xf32> -> vector<8x8xf32>
    %108 = tpu.concatenate %32, %57, %82, %107 in 1 : vector<8x8xf32>, vector<8x8xf32>, vector<8x8xf32>, vector<8x8xf32> -> vector<8x32xf32>
    %c0_57 = arith.constant 0 : index
    %c0_58 = arith.constant 0 : index
    %c0_59 = arith.constant 0 : index
    %109 = vector.load %arg6[%c0_57, %c0_58, %c0_59] : memref<1x8x32xf32, #tpu.memory_space<vmem>>, vector<1x8x32xf32>
    %110 = vector.shape_cast %109 : vector<1x8x32xf32> to vector<8x32xf32>
    %111 = vector.shape_cast %108 : vector<8x32xf32> to vector<1x8x32xf32>
    tpu.vector_store %arg6[%c0_57, %c0_58, %c0_59], %111 {strides = array<i32>} : memref<1x8x32xf32, #tpu.memory_space<vmem>>, vector<1x8x32xf32>,
    return
  }
  func.func @transform_0(%arg0: i32, %arg1: i32) -> (i32, i32, i32) {
    %c0_i32 = arith.constant 0 : i32
    %c0_i32_0 = arith.constant 0 : i32
    return %arg0, %arg1, %c0_i32 : i32, i32, i32
  }
  func.func @transform_1(%arg0: i32, %arg1: i32) -> (i32, i32, i32) {
    %c0_i32 = arith.constant 0 : i32
    %c0_i32_0 = arith.constant 0 : i32
    %c0_i32_1 = arith.constant 0 : i32
    return %arg0, %c0_i32, %c0_i32_0 : i32, i32, i32
  }
  func.func @transform_2(%arg0: i32, %arg1: i32) -> (i32, i32, i32) {
    %c0_i32 = arith.constant 0 : i32
    %c0_i32_0 = arith.constant 0 : i32
    %c0_i32_1 = arith.constant 0 : i32
    return %arg0, %c0_i32, %c0_i32_0 : i32, i32, i32
  }
  func.func @transform_3(%arg0: i32, %arg1: i32) -> (i32, i32, i32, i32) {
    %c0_i32 = arith.constant 0 : i32
    %c0_i32_0 = arith.constant 0 : i32
    %c0_i32_1 = arith.constant 0 : i32
    return %arg0, %c0_i32, %arg1, %c0_i32_0 : i32, i32, i32, i32
  }
  func.func @transform_4(%arg0: i32, %arg1: i32) -> (i32, i32, i32) {
    %c0_i32 = arith.constant 0 : i32
    %c0_i32_0 = arith.constant 0 : i32
    return %arg0, %arg1, %c0_i32 : i32, i32, i32
  }
  func.func @transform_5(%arg0: i32, %arg1: i32) -> (i32, i32, i32, i32) {
    %c0_i32 = arith.constant 0 : i32
    %c0_i32_0 = arith.constant 0 : i32
    %c0_i32_1 = arith.constant 0 : i32
    return %arg0, %c0_i32, %arg1, %c0_i32_0 : i32, i32, i32, i32
  }
}

</mosaic_0001>

<llo_original>
// kernel: tpu_custom_call.1
$region0: #{tpu_custom_call.1}
  #allocation0 [shape = 'u32[]', space=smem, size = 0x4, offset = 0x4, fixed_abs, tag = 'smem constant byte address 0x4 - core index']
  #allocation1 [shape = 'u32[144,128]{1,0:T(1,128)}', space=vmem, size = 0x12000, scoped, tag = 'internal scratch']
  %s0 = inlined_call_operand.hbm [shape: f32[2,8,32], index: 0, kind: input, shape index: {}]
  %s1 = inlined_call_operand.hbm [shape: f32[2,8,32], index: 1, kind: input, shape index: {}]
  %s2 = inlined_call_operand.hbm [shape: f32[2,8,32], index: 2, kind: input, shape index: {}]
  %s3 = inlined_call_operand.hbm [shape: f32[2,4,8,8], index: 3, kind: input, shape index: {}]
  %s4 = inlined_call_operand.hbm [shape: f32[2,8,32], index: 4, kind: output, shape index: {0}]
  %s5 = inlined_call_operand.hbm [shape: f32[2,4,8,8], index: 5, kind: output, shape index: {1}]
  %6 = xla_tuple %s4, %s5
  %s7 = sld [smem:[#allocation0]]
  $region73: #{tpu_custom_call.1} parent=0
    _
  %s9 = ssub.s32 1, %s7
  %s10 = scalar_select 0, %s9, %s7
  $region1: #{tpu_custom_call.1} parent=0
    #allocation2 [shape = 'u8[8192]{0}', space=vmem, size = 0x2000, scoped, tag = 'input window, operand 0']
    #allocation3 [shape = 's32[2]{0}', space=sflag, size = 0x8, scoped, tag = 'scoped memory for tpu_custom_call.1']
    #allocation4 [shape = 's32[2]{0}', space=sflag, size = 0x8, scoped, tag = 'scoped memory for tpu_custom_call.1']
    #allocation5 [shape = 'u8[8192]{0}', space=vmem, size = 0x2000, scoped, tag = 'input window, operand 1']
    #allocation6 [shape = 's32[2]{0}', space=sflag, size = 0x8, scoped, tag = 'scoped memory for tpu_custom_call.1']
    #allocation7 [shape = 'u8[8192]{0}', space=vmem, size = 0x2000, scoped, tag = 'input window, operand 2']
    #allocation8 [shape = 'u8[32768]{0}', space=vmem, size = 0x8000, scoped, tag = 'input window, operand 3']
    #allocation9 [shape = 's32[2]{0}', space=sflag, size = 0x8, scoped, tag = 'scoped memory for tpu_custom_call.1']
    #allocation10 [shape = 'u8[8192]{0}', space=vmem, size = 0x2000, scoped, tag = 'output window, operand 0']
    #allocation11 [shape = 'u8[32768]{0}', space=vmem, size = 0x8000, scoped, tag = 'output window, operand 1']
    #allocation12 [shape = 's32[2]{0}', space=sflag, size = 0x8, scoped, tag = 'scoped memory for tpu_custom_call.1']
    %11 = vsyncpa [#allocation3], 0
    %s12 = scalar_lea.sflag [#allocation3], 1
    %13 = vsyncpa %s12, 0
    %14 = vsyncpa [#allocation6], 0
    %s15 = scalar_lea.sflag [#allocation6], 1
    %16 = vsyncpa %s15, 0
    %17 = vsyncpa [#allocation9], 0
    %s18 = scalar_lea.sflag [#allocation9], 1
    %19 = vsyncpa %s18, 0
    %20 = vsyncpa [#allocation4], 0
    %s21 = scalar_lea.sflag [#allocation4], 1
    %22 = vsyncpa %s21, 0
    %23 = vsyncpa [#allocation12], 0
    %s24 = scalar_lea.sflag [#allocation12], 1
    %25 = vsyncpa %s24, 0
    loop: start=0, step=1, limit=4
    $region2: #{tpu_custom_call.1} parent=1 // loop_pre_header
      _
    $region3: #{tpu_custom_call.1} parent=1 // loop_header
      %s27 = sphi 0, %s31
      %p28 = scmp.ge.s32.totalorder %s27, 4
      %s34 = sphi 0, %s46
      %s35 = sphi 0, %s42
      %s36 = sphi 0, %s34
      %s37 = sphi 0, %s35
      %s38 = sphi 0, %s36
      %s39 = sphi 0, %s37
      %s51 = sphi 0, %s53
      %s54 = sphi 0, %s51
      %s55 = sphi 0, %s54
      %s71 = sphi 0, %s55
      %s77 = sphi 0, %s79
      %s80 = sphi 0, %s77
      %s81 = sphi 0, %s80
      %s97 = sphi 0, %s81
      %s103 = sphi 0, %s105
      %s106 = sphi 0, %s103
      %s107 = sphi 0, %s106
      %s123 = sphi 0, %s107
      %s131 = sphi 0, %s133
      %s134 = sphi 0, %s131
      %s135 = sphi 0, %s134
      %s151 = sphi 0, %s135
      %s159 = sphi 0, %s161
      %s162 = sphi 0, %s159
      %s163 = sphi 0, %s162
      %s179 = sphi 0, %s163
      %s187 = sphi 0, %s189
      %s190 = sphi 0, %s187
      %s191 = sphi 0, %s190
      %s207 = sphi 0, %s191
    $region4: #{tpu_custom_call.1} parent=1 // loop_header_branch
      %30 = sbr.rel (%p28) target = $region8
    $region5: #{tpu_custom_call.1} parent=1 // loop_body
      %s32 = ssub.s32 %s27, 1
      %s33 = ssub.s32 %s27, 2
      %s40 = sadd.s32 1, %s35
      %p41 = scmp.ge.s32.totalorder %s40, 1
      %s42 = scalar_select %p41, 0, %s40
      %s43 = sadd.s32 1, %s34
      %s44 = scalar_select %p41, %s43, %s34
      %p45 = scmp.ge.s32.totalorder %s44, 2
      %s46 = scalar_select %p45, 0, %s44
      %s47 = ssub.s32 %s34, %s46
      %s48 = ssub.s32 %s35, %s42
      %s49 = sor.u32 %s47, %s48
      %p50 = scmp.eq.s32.totalorder %s49, 0
      %s52 = sadd.s32 %s51, 1
      %s53 = scalar_select %p50, %s51, %s52
      %p56 = pneg %p50
      %p57 = scmp.eq.s32.totalorder %s27, 1
      %p58 = por %p56, %p57
      %p59 = scmp.ne.s32.totalorder %s51, %s54
      %p60 = scmp.eq.s32.totalorder %s27, 0
      %p61 = por %p59, %p60
      %p62 = scmp.ne.s32.totalorder %s51, %s54
      %p63 = scmp.eq.s32.totalorder %s32, 1
      %p64 = por %p62, %p63
      %p65 = scmp.ne.s32.totalorder %s54, %s55
      %p66 = scmp.eq.s32.totalorder %s32, 0
      %p67 = por %p65, %p66
      %p68 = scmp.ne.s32.totalorder %s54, %s55
      %p69 = scmp.eq.s32.totalorder %s33, 1
      %p70 = por %p68, %p69
      %p72 = scmp.ne.s32.totalorder %s55, %s71
      %p73 = scmp.eq.s32.totalorder %s33, 0
      %p74 = por %p72, %p73
      %s75 = ssub.s32 %s34, %s46
      %p76 = scmp.eq.s32.totalorder %s75, 0
      %s78 = sadd.s32 %s77, 1
      %s79 = scalar_select %p76, %s77, %s78
      %p82 = pneg %p76
      %p83 = scmp.eq.s32.totalorder %s27, 1
      %p84 = por %p82, %p83
      %p85 = scmp.ne.s32.totalorder %s77, %s80
      %p86 = scmp.eq.s32.totalorder %s27, 0
      %p87 = por %p85, %p86
      %p88 = scmp.ne.s32.totalorder %s77, %s80
      %p89 = scmp.eq.s32.totalorder %s32, 1
      %p90 = por %p88, %p89
      %p91 = scmp.ne.s32.totalorder %s80, %s81
      %p92 = scmp.eq.s32.totalorder %s32, 0
      %p93 = por %p91, %p92
      %p94 = scmp.ne.s32.totalorder %s80, %s81
      %p95 = scmp.eq.s32.totalorder %s33, 1
      %p96 = por %p94, %p95
      %p98 = scmp.ne.s32.totalorder %s81, %s97
      %p99 = scmp.eq.s32.totalorder %s33, 0
      %p100 = por %p98, %p99
      %s101 = ssub.s32 %s34, %s46
      %p102 = scmp.eq.s32.totalorder %s101, 0
      %s104 = sadd.s32 %s103, 1
      %s105 = scalar_select %p102, %s103, %s104
      %p108 = pneg %p102
      %p109 = scmp.eq.s32.totalorder %s27, 1
      %p110 = por %p108, %p109
      %p111 = scmp.ne.s32.totalorder %s103, %s106
      %p112 = scmp.eq.s32.totalorder %s27, 0
      %p113 = por %p111, %p112
      %p114 = scmp.ne.s32.totalorder %s103, %s106
      %p115 = scmp.eq.s32.totalorder %s32, 1
      %p116 = por %p114, %p115
      %p117 = scmp.ne.s32.totalorder %s106, %s107
      %p118 = scmp.eq.s32.totalorder %s32, 0
      %p119 = por %p117, %p118
      %p120 = scmp.ne.s32.totalorder %s106, %s107
      %p121 = scmp.eq.s32.totalorder %s33, 1
      %p122 = por %p120, %p121
      %p124 = scmp.ne.s32.totalorder %s107, %s123
      %p125 = scmp.eq.s32.totalorder %s33, 0
      %p126 = por %p124, %p125
      %s127 = ssub.s32 %s34, %s46
      %s128 = ssub.s32 %s35, %s42
      %s129 = sor.u32 %s127, %s128
      %p130 = scmp.eq.s32.totalorder %s129, 0
      %s132 = sadd.s32 %s131, 1
      %s133 = scalar_select %p130, %s131, %s132
      %p136 = pneg %p130
      %p137 = scmp.eq.s32.totalorder %s27, 1
      %p138 = por %p136, %p137
      %p139 = scmp.ne.s32.totalorder %s131, %s134
      %p140 = scmp.eq.s32.totalorder %s27, 0
      %p141 = por %p139, %p140
      %p142 = scmp.ne.s32.totalorder %s131, %s134
      %p143 = scmp.eq.s32.totalorder %s32, 1
      %p144 = por %p142, %p143
      %p145 = scmp.ne.s32.totalorder %s134, %s135
      %p146 = scmp.eq.s32.totalorder %s32, 0
      %p147 = por %p145, %p146
      %p148 = scmp.ne.s32.totalorder %s134, %s135
      %p149 = scmp.eq.s32.totalorder %s33, 1
      %p150 = por %p148, %p149
      %p152 = scmp.ne.s32.totalorder %s135, %s151
      %p153 = scmp.eq.s32.totalorder %s33, 0
      %p154 = por %p152, %p153
      %s155 = ssub.s32 %s34, %s46
      %s156 = ssub.s32 %s35, %s42
      %s157 = sor.u32 %s155, %s156
      %p158 = scmp.eq.s32.totalorder %s157, 0
      %s160 = sadd.s32 %s159, 1
      %s161 = scalar_select %p158, %s159, %s160
      %p164 = pneg %p158
      %p165 = scmp.eq.s32.totalorder %s27, 1
      %p166 = por %p164, %p165
      %p167 = scmp.ne.s32.totalorder %s159, %s162
      %p168 = scmp.eq.s32.totalorder %s27, 0
      %p169 = por %p167, %p168
      %p170 = scmp.ne.s32.totalorder %s159, %s162
      %p171 = scmp.eq.s32.totalorder %s32, 1
      %p172 = por %p170, %p171
      %p173 = scmp.ne.s32.totalorder %s162, %s163
      %p174 = scmp.eq.s32.totalorder %s32, 0
      %p175 = por %p173, %p174
      %p176 = scmp.ne.s32.totalorder %s162, %s163
      %p177 = scmp.eq.s32.totalorder %s33, 1
      %p178 = por %p176, %p177
      %p180 = scmp.ne.s32.totalorder %s163, %s179
      %p181 = scmp.eq.s32.totalorder %s33, 0
      %p182 = por %p180, %p181
      %s183 = ssub.s32 %s34, %s46
      %s184 = ssub.s32 %s35, %s42
      %s185 = sor.u32 %s183, %s184
      %p186 = scmp.eq.s32.totalorder %s185, 0
      %s188 = sadd.s32 %s187, 1
      %s189 = scalar_select %p186, %s187, %s188
      %p192 = pneg %p186
      %p193 = scmp.eq.s32.totalorder %s27, 1
      %p194 = por %p192, %p193
      %p195 = scmp.ne.s32.totalorder %s187, %s190
      %p196 = scmp.eq.s32.totalorder %s27, 0
      %p197 = por %p195, %p196
      %p198 = scmp.ne.s32.totalorder %s187, %s190
      %p199 = scmp.eq.s32.totalorder %s32, 1
      %p200 = por %p198, %p199
      %p201 = scmp.ne.s32.totalorder %s190, %s191
      %p202 = scmp.eq.s32.totalorder %s32, 0
      %p203 = por %p201, %p202
      %p204 = scmp.ne.s32.totalorder %s190, %s191
      %p205 = scmp.eq.s32.totalorder %s33, 1
      %p206 = por %p204, %p205
      %p208 = scmp.ne.s32.totalorder %s191, %s207
      %p209 = scmp.eq.s32.totalorder %s33, 0
      %p210 = por %p208, %p209
      %p211 = scmp.le.s32.totalorder 1, %s27
      %p212 = scmp.lt.s32.totalorder %s27, 3
      %p213 = pnand %p211, %p212
      %p214 = pneg %p213
      // Predicated region
      $region9: #{tpu_custom_call.1} parent=5 // pred_check
        _
      $region10: #{tpu_custom_call.1} parent=5 // pred_check_branch
        %216 = sbr.rel (%p213) target = $region12
      $region11: #{tpu_custom_call.1} parent=5 // pred_region
        %s217 = ssub.s32 %s27, 1
      $region12: #{tpu_custom_call.1} parent=5 // pred_fallthru
        _
      %p218 = scmp.lt.s32.totalorder %s27, 2
      // Predicated region
      $region13: #{tpu_custom_call.1} parent=5 // pred_check
        %p219 = pneg %p218
      $region14: #{tpu_custom_call.1} parent=5 // pred_check_branch
        %221 = sbr.rel (%p219) target = $region16
      $region15: #{tpu_custom_call.1} parent=5 // pred_region
        // Predicated region
        $region17: #{tpu_custom_call.1} parent=15 // pred_check
          %p222 = pneg %p61
        $region18: #{tpu_custom_call.1} parent=15 // pred_check_branch
          %224 = sbr.rel (%p222) target = $region20
        $region19: #{tpu_custom_call.1} parent=15 // pred_region
          %s225 = sand.u32 %s51, 1
          %s226 = scalar_lea.sflag [#allocation3], %s225
          %s227 = sand.u32 %s51, 1
          %s228 = smul.addr %s227, 8
          %s229 = scalar_lea.vmem [#allocation2], %s228
          %s231 = ssub.s32 128, 128
          %232 = vsyncadd %s226, %s231
          %s233 = sadd.s32 %s35, %s34
          %s234 = smul.addr %s233, 128
          %s235 = scalar_lea.hbm %s0, %s234
          %s237 = sshll.u32 %s229, 4
          %s238 = int_to_ptr.vmem [resolvable:$true] %s237
          %240 = dma.hbm_to_vmem [thread:$0]  %s235, 128, %s238, %s226
        $region20: #{tpu_custom_call.1} parent=15 // pred_fallthru
          _
        // Predicated region
        $region21: #{tpu_custom_call.1} parent=15 // pred_check
          %p241 = pneg %p87
        $region22: #{tpu_custom_call.1} parent=15 // pred_check_branch
          %243 = sbr.rel (%p241) target = $region24
        $region23: #{tpu_custom_call.1} parent=15 // pred_region
          %s244 = sand.u32 %s27, 1
          %s245 = scalar_lea.sflag [#allocation6], %s244
          %s246 = sand.u32 %s77, 1
          %s247 = smul.addr %s246, 8
          %s248 = scalar_lea.vmem [#allocation5], %s247
          %s250 = ssub.s32 128, 128
          %251 = vsyncadd %s245, %s250
          %s252 = smul.addr %s34, 128
          %s253 = scalar_lea.hbm %s1, %s252
          %s255 = sshll.u32 %s248, 4
          %s256 = int_to_ptr.vmem [resolvable:$true] %s255
          %258 = dma.hbm_to_vmem [thread:$0]  %s253, 128, %s256, %s245
        $region24: #{tpu_custom_call.1} parent=15 // pred_fallthru
          _
        // Predicated region
        $region25: #{tpu_custom_call.1} parent=15 // pred_check
          %p259 = pneg %p113
        $region26: #{tpu_custom_call.1} parent=15 // pred_check_branch
          %261 = sbr.rel (%p259) target = $region28
        $region27: #{tpu_custom_call.1} parent=15 // pred_region
          %s262 = sand.u32 %s27, 1
          %s263 = scalar_lea.sflag [#allocation6], %s262
          %s264 = sand.u32 %s103, 1
          %s265 = smul.addr %s264, 8
          %s266 = scalar_lea.vmem [#allocation7], %s265
          %s268 = ssub.s32 128, 128
          %269 = vsyncadd %s263, %s268
          %s270 = smul.addr %s34, 128
          %s271 = scalar_lea.hbm %s2, %s270
          %s273 = sshll.u32 %s266, 4
          %s274 = int_to_ptr.vmem [resolvable:$true] %s273
          %276 = dma.hbm_to_vmem [thread:$0]  %s271, 128, %s274, %s263
        $region28: #{tpu_custom_call.1} parent=15 // pred_fallthru
          _
        // Predicated region
        $region29: #{tpu_custom_call.1} parent=15 // pred_check
          %p277 = pneg %p141
        $region30: #{tpu_custom_call.1} parent=15 // pred_check_branch
          %279 = sbr.rel (%p277) target = $region32
        $region31: #{tpu_custom_call.1} parent=15 // pred_region
          %s280 = sand.u32 %s131, 1
          %s281 = scalar_lea.sflag [#allocation9], %s280
          %s282 = sand.u32 %s131, 1
          %s283 = smul.addr %s282, 32
          %s284 = scalar_lea.vmem [#allocation8], %s283
          %s286 = ssub.s32 512, 512
          %287 = vsyncadd %s281, %s286
          %s288 = smul.addr %s34, 4
          %s289 = sadd.s32 %s35, %s288
          %s290 = smul.addr %s289, 128
          %s291 = scalar_lea.hbm %s3, %s290
          %s292 = sshll.u32 %s284, 4
          %s293 = int_to_ptr.vmem [resolvable:$true] %s292
          %298 = dma.hbm_to_vmem [thread:$0]  %s291, 512, %s293, %s281, 128, 128, 8
        $region32: #{tpu_custom_call.1} parent=15 // pred_fallthru
          _
      $region16: #{tpu_custom_call.1} parent=5 // pred_fallthru
        _
      %p299 = scmp.le.s32.totalorder 1, %s27
      %p300 = scmp.lt.s32.totalorder %s27, 3
      %p301 = pnand %p299, %p300
      %p302 = pneg %p301
      // Predicated region
      $region33: #{tpu_custom_call.1} parent=5 // pred_check
        _
      $region34: #{tpu_custom_call.1} parent=5 // pred_check_branch
        %304 = sbr.rel (%p301) target = $region36
      $region35: #{tpu_custom_call.1} parent=5 // pred_region
        %s305 = ssub.s32 %s27, 1
        %s306 = sand.u32 %s54, 1
        %s307 = scalar_lea.sflag [#allocation3], %s306
        %s308 = sand.u32 %s54, 1
        %s309 = smul.addr %s308, 8
        %s310 = scalar_lea.vmem [#allocation2], %s309
        // Predicated region
        $region37: #{tpu_custom_call.1} parent=35 // pred_check
          %p311 = pneg %p67
        $region38: #{tpu_custom_call.1} parent=35 // pred_check_branch
          %313 = sbr.rel (%p311) target = $region40
        $region39: #{tpu_custom_call.1} parent=35 // pred_region
          %314 = dma.done %s307, 128
        $region40: #{tpu_custom_call.1} parent=35 // pred_fallthru
          _
        %s315 = sand.u32 %s32, 1
        %s316 = scalar_lea.sflag [#allocation6], %s315
        %s317 = sand.u32 %s80, 1
        %s318 = smul.addr %s317, 8
        %s319 = scalar_lea.vmem [#allocation5], %s318
        // Predicated region
        $region41: #{tpu_custom_call.1} parent=35 // pred_check
          %p320 = pneg %p93
        $region42: #{tpu_custom_call.1} parent=35 // pred_check_branch
          %322 = sbr.rel (%p320) target = $region44
        $region43: #{tpu_custom_call.1} parent=35 // pred_region
          %323 = dma.done %s316, 128
        $region44: #{tpu_custom_call.1} parent=35 // pred_fallthru
          _
        %s324 = sand.u32 %s32, 1
        %s325 = scalar_lea.sflag [#allocation6], %s324
        %s326 = sand.u32 %s106, 1
        %s327 = smul.addr %s326, 8
        %s328 = scalar_lea.vmem [#allocation7], %s327
        // Predicated region
        $region45: #{tpu_custom_call.1} parent=35 // pred_check
          %p329 = pneg %p119
        $region46: #{tpu_custom_call.1} parent=35 // pred_check_branch
          %331 = sbr.rel (%p329) target = $region48
        $region47: #{tpu_custom_call.1} parent=35 // pred_region
          %332 = dma.done %s325, 128
        $region48: #{tpu_custom_call.1} parent=35 // pred_fallthru
          _
        %s333 = sand.u32 %s134, 1
        %s334 = scalar_lea.sflag [#allocation9], %s333
        %s335 = sand.u32 %s134, 1
        %s336 = smul.addr %s335, 32
        %s337 = scalar_lea.vmem [#allocation8], %s336
        // Predicated region
        $region49: #{tpu_custom_call.1} parent=35 // pred_check
          %p338 = pneg %p147
        $region50: #{tpu_custom_call.1} parent=35 // pred_check_branch
          %340 = sbr.rel (%p338) target = $region52
        $region51: #{tpu_custom_call.1} parent=35 // pred_region
          %341 = dma.done %s334, 512
        $region52: #{tpu_custom_call.1} parent=35 // pred_fallthru
          _
        %s342 = sand.u32 %s54, 1
        %s343 = scalar_lea.sflag [#allocation3], %s342
        %s344 = sand.u32 %s54, 1
        %s345 = smul.addr %s344, 8
        %s346 = scalar_lea.vmem [#allocation2], %s345
        %p347 = pneg %p67
        %p348 = pneg %p64
        %s349 = sand.u32 %s32, 1
        %s350 = scalar_lea.sflag [#allocation6], %s349
        %s351 = sand.u32 %s80, 1
        %s352 = smul.addr %s351, 8
        %s353 = scalar_lea.vmem [#allocation5], %s352
        %p354 = pneg %p93
        %p355 = pneg %p90
        %s356 = sand.u32 %s32, 1
        %s357 = scalar_lea.sflag [#allocation6], %s356
        %s358 = sand.u32 %s106, 1
        %s359 = smul.addr %s358, 8
        %s360 = scalar_lea.vmem [#allocation7], %s359
        %p361 = pneg %p119
        %p362 = pneg %p116
        %s363 = sand.u32 %s134, 1
        %s364 = scalar_lea.sflag [#allocation9], %s363
        %s365 = sand.u32 %s134, 1
        %s366 = smul.addr %s365, 32
        %s367 = scalar_lea.vmem [#allocation8], %s366
        %p368 = pneg %p147
        %p369 = pneg %p144
        %p370 = pneg %p175
        %p371 = pneg %p172
        %s372 = sand.u32 %s162, 1
        %s373 = scalar_lea.sflag [#allocation4], %s372
        %s374 = sand.u32 %s162, 1
        %s375 = smul.addr %s374, 8
        %s376 = scalar_lea.vmem [#allocation10], %s375
        %p377 = pneg %p203
        %p378 = pneg %p200
        %s379 = sand.u32 %s190, 1
        %s380 = scalar_lea.sflag [#allocation12], %s379
        %s381 = sand.u32 %s190, 1
        %s382 = smul.addr %s381, 32
        %s383 = scalar_lea.vmem [#allocation11], %s382
        %v384 = vld [vmem:[%s310] sm:$0xff]
        %v385 = vmul.f32 %v384, 0.35355338
        %v386 = vld [vmem:[%s319] sm:$0xff]
        %v387 = vld [vmem:[%s328] sm:$0xff]
        %v388 = vld [vmem:[%s337] sm:$0xff]
        %vm389 = vcmask 64512
        %v391 = vsel %vm389, %v385, 0
        %v394 = vsel %vm389, %v386, 0
        %396 = vmatprep.subr.mxu0 0.0
        %397 = vmatpush1.xpose.msra.mxu0 %v394
        %398 = vmatprep.subr.mxu0 0.0
        %399 = vmatpush1.xpose.msra.mxu0 0.0
        %400 = vmatprep.subr.mxu0 0.0
        %401 = vmatpush1.xpose.msra.mxu0 0.0
        %402 = vmatprep.subr.mxu0 0.0
        %403 = vmatpush1.xpose.msra.mxu0 0.0
        %404 = vmatprep.subr.mxu0 0.0
        %405 = vmatpush1.xpose.msra.mxu0 0.0
        %406 = vmatprep.subr.mxu0 0.0
        %407 = vmatpush1.xpose.msra.mxu0 0.0
        %408 = vmatprep.subr.mxu0 0.0
        %409 = vmatpush1.xpose.msra.mxu0 0.0
        %410 = vmatprep.subr.mxu0 0.0
        %411 = vmatpush1.xpose.msra.mxu0 0.0
        %412 = vmatprep.subr.mxu0 0.0
        %413 = vmatpush1.xpose.msra.mxu0 0.0
        %414 = vmatprep.subr.mxu0 0.0
        %415 = vmatpush1.xpose.msra.mxu0 0.0
        %416 = vmatprep.subr.mxu0 0.0
        %417 = vmatpush1.xpose.msra.mxu0 0.0
        %418 = vmatprep.subr.mxu0 0.0
        %419 = vmatpush1.xpose.msra.mxu0 0.0
        %420 = vmatprep.subr.mxu0 0.0
        %421 = vmatpush1.xpose.msra.mxu0 0.0
        %422 = vmatprep.subr.mxu0 0.0
        %423 = vmatpush1.xpose.msra.mxu0 0.0
        %424 = vmatprep.subr.mxu0 0.0
        %425 = vmatpush1.xpose.msra.mxu0 0.0
        %426 = vmatprep.subr.mxu0 0.0
        %427 = vmatpush1.xpose.msra.mxu0 0.0
        %428 = vmatprep.subr.mxu0 0.0
        %429 = vmatpush1.xpose.msra.mxu0 0.0
        %430 = vmatprep.subr.mxu0 0.0
        %431 = vmatpush1.xpose.msra.mxu0 0.0
        %432 = vmatprep.subr.mxu0 0.0
        %433 = vmatpush1.xpose.msra.mxu0 0.0
        %434 = vmatprep.subr.mxu0 0.0
        %435 = vmatpush1.xpose.msra.mxu0 0.0
        %436 = vmatprep.subr.mxu0 0.0
        %437 = vmatpush1.xpose.msra.mxu0 0.0
        %438 = vmatprep.subr.mxu0 0.0
        %439 = vmatpush1.xpose.msra.mxu0 0.0
        %440 = vmatprep.subr.mxu0 0.0
        %441 = vmatpush1.xpose.msra.mxu0 0.0
        %442 = vmatprep.subr.mxu0 0.0
        %443 = vmatpush1.xpose.msra.mxu0 0.0
        %444 = vmatprep.subr.mxu0 0.0
        %445 = vmatpush1.xpose.msra.mxu0 0.0
        %446 = vmatprep.subr.mxu0 0.0
        %447 = vmatpush1.xpose.msra.mxu0 0.0
        %448 = vmatprep.subr.mxu0 0.0
        %449 = vmatpush1.xpose.msra.mxu0 0.0
        %450 = vmatprep.subr.mxu0 0.0
        %451 = vmatpush1.xpose.msra.mxu0 0.0
        %452 = vmatprep.subr.mxu0 0.0
        %453 = vmatpush1.xpose.msra.mxu0 0.0
        %454 = vmatprep.subr.mxu0 0.0
        %455 = vmatpush1.xpose.msra.mxu0 0.0
        %456 = vmatprep.subr.mxu0 0.0
        %457 = vmatpush1.xpose.msra.mxu0 0.0
        %458 = vmatprep.subr.mxu0 0.0
        %459 = vmatpush1.xpose.msra.mxu0 0.0
        %460 = vmatprep.mubr.f32.mxu0 0.0
        %461 = vmatmul.mubr.f32.gmra.mrb[0].mxu0 %v391
        %v462 = vpop.f32.mrb[0].mxu0
        %v463 = vadd.f32 %v388, %v462
        %v464 = vpop.f32.mrb[0].mxu0
        %465 = vdwg.mxu0
        %466 = vst.msk [vmem:[%s383] sm:$0xff] %vm389, %v463
        %v467 = vsel %vm389, %v463, -inf
        %468 = vmax.xlane.f32.xlu0 %v467
        %v469 = vpop.xlane.xlu0 %468
        %v470 = vsub.f32 %v463, %v469
        %v471 = vmul.f32 %v470, 1.442695
        %v472 = vpow.pop %v471
        %v473 = vsel %vm389, %v472, 0.0
        %474 = vadd.xlane.f32.xlu0 %v473
        %v475 = vpop.xlane.xlu0 %474
        %v476 = vrcp.pop %v475
        %v477 = vmul.f32 %v475, %v476
        %v478 = vsub.f32 2.0, %v477
        %v479 = vmul.f32 %v476, %v478
        %v480 = vmul.f32 %v472, %v479
        %v482 = vsel %vm389, %v480, 0
        %484 = vmatprep.subr.mxu0 0.0
        %485 = vmatpush1.msra.mxu0 %v387
        %486 = vmatprep.subr.mxu0 0.0
        %487 = vmatpush1.msra.mxu0 0.0
        %488 = vmatprep.subr.mxu0 0.0
        %489 = vmatpush1.msra.mxu0 0.0
        %490 = vmatprep.subr.mxu0 0.0
        %491 = vmatpush1.msra.mxu0 0.0
        %492 = vmatprep.subr.mxu0 0.0
        %493 = vmatpush1.msra.mxu0 0.0
        %494 = vmatprep.subr.mxu0 0.0
        %495 = vmatpush1.msra.mxu0 0.0
        %496 = vmatprep.subr.mxu0 0.0
        %497 = vmatpush1.msra.mxu0 0.0
        %498 = vmatprep.subr.mxu0 0.0
        %499 = vmatpush1.msra.mxu0 0.0
        %500 = vmatprep.subr.mxu0 0.0
        %501 = vmatpush1.msra.mxu0 0.0
        %502 = vmatprep.subr.mxu0 0.0
        %503 = vmatpush1.msra.mxu0 0.0
        %504 = vmatprep.subr.mxu0 0.0
        %505 = vmatpush1.msra.mxu0 0.0
        %506 = vmatprep.subr.mxu0 0.0
        %507 = vmatpush1.msra.mxu0 0.0
        %508 = vmatprep.subr.mxu0 0.0
        %509 = vmatpush1.msra.mxu0 0.0
        %510 = vmatprep.subr.mxu0 0.0
        %511 = vmatpush1.msra.mxu0 0.0
        %512 = vmatprep.subr.mxu0 0.0
        %513 = vmatpush1.msra.mxu0 0.0
        %514 = vmatprep.subr.mxu0 0.0
        %515 = vmatpush1.msra.mxu0 0.0
        %516 = vmatprep.subr.mxu0 0.0
        %517 = vmatpush1.msra.mxu0 0.0
        %518 = vmatprep.subr.mxu0 0.0
        %519 = vmatpush1.msra.mxu0 0.0
        %520 = vmatprep.subr.mxu0 0.0
        %521 = vmatpush1.msra.mxu0 0.0
        %522 = vmatprep.subr.mxu0 0.0
        %523 = vmatpush1.msra.mxu0 0.0
        %524 = vmatprep.subr.mxu0 0.0
        %525 = vmatpush1.msra.mxu0 0.0
        %526 = vmatprep.subr.mxu0 0.0
        %527 = vmatpush1.msra.mxu0 0.0
        %528 = vmatprep.subr.mxu0 0.0
        %529 = vmatpush1.msra.mxu0 0.0
        %530 = vmatprep.subr.mxu0 0.0
        %531 = vmatpush1.msra.mxu0 0.0
        %532 = vmatprep.subr.mxu0 0.0
        %533 = vmatpush1.msra.mxu0 0.0
        %534 = vmatprep.subr.mxu0 0.0
        %535 = vmatpush1.msra.mxu0 0.0
        %536 = vmatprep.subr.mxu0 0.0
        %537 = vmatpush1.msra.mxu0 0.0
        %538 = vmatprep.subr.mxu0 0.0
        %539 = vmatpush1.msra.mxu0 0.0
        %540 = vmatprep.subr.mxu0 0.0
        %541 = vmatpush1.msra.mxu0 0.0
        %542 = vmatprep.subr.mxu0 0.0
        %543 = vmatpush1.msra.mxu0 0.0
        %544 = vmatprep.subr.mxu0 0.0
        %545 = vmatpush1.msra.mxu0 0.0
        %546 = vmatprep.subr.mxu0 0.0
        %547 = vmatpush1.msra.mxu0 0.0
        %548 = vmatprep.mubr.f32.mxu0 0.0
        %549 = vmatmul.mubr.f32.gmra.mrb[0].mxu0 %v482
        %v550 = vpop.f32.mrb[0].mxu0
        %v551 = vadd.f32 0.0, %v550
        %v552 = vpop.f32.mrb[0].mxu0
        %553 = vdwg.mxu0
        %s554 = scalar_lea.vmem %s337, 8 [#allocation8]
        %v555 = vld [vmem:[%s554] sm:$0xff]
        %556 = vrot.lane.b32.xlu0 %v385, 120
        %v557 = vpop.permute.xlu0 %556
        %558 = vrot.lane.b32.xlu0 %v386, 120
        %v559 = vpop.permute.xlu0 %558
        %v560 = vsel %vm389, %v557, 0
        %v562 = vsel %vm389, %v559, 0
        %564 = vmatprep.subr.mxu0 0.0
        %565 = vmatpush1.xpose.msra.mxu0 %v562
        %566 = vmatprep.subr.mxu0 0.0
        %567 = vmatpush1.xpose.msra.mxu0 0.0
        %568 = vmatprep.subr.mxu0 0.0
        %569 = vmatpush1.xpose.msra.mxu0 0.0
        %570 = vmatprep.subr.mxu0 0.0
        %571 = vmatpush1.xpose.msra.mxu0 0.0
        %572 = vmatprep.subr.mxu0 0.0
        %573 = vmatpush1.xpose.msra.mxu0 0.0
        %574 = vmatprep.subr.mxu0 0.0
        %575 = vmatpush1.xpose.msra.mxu0 0.0
        %576 = vmatprep.subr.mxu0 0.0
        %577 = vmatpush1.xpose.msra.mxu0 0.0
        %578 = vmatprep.subr.mxu0 0.0
        %579 = vmatpush1.xpose.msra.mxu0 0.0
        %580 = vmatprep.subr.mxu0 0.0
        %581 = vmatpush1.xpose.msra.mxu0 0.0
        %582 = vmatprep.subr.mxu0 0.0
        %583 = vmatpush1.xpose.msra.mxu0 0.0
        %584 = vmatprep.subr.mxu0 0.0
        %585 = vmatpush1.xpose.msra.mxu0 0.0
        %586 = vmatprep.subr.mxu0 0.0
        %587 = vmatpush1.xpose.msra.mxu0 0.0
        %588 = vmatprep.subr.mxu0 0.0
        %589 = vmatpush1.xpose.msra.mxu0 0.0
        %590 = vmatprep.subr.mxu0 0.0
        %591 = vmatpush1.xpose.msra.mxu0 0.0
        %592 = vmatprep.subr.mxu0 0.0
        %593 = vmatpush1.xpose.msra.mxu0 0.0
        %594 = vmatprep.subr.mxu0 0.0
        %595 = vmatpush1.xpose.msra.mxu0 0.0
        %596 = vmatprep.subr.mxu0 0.0
        %597 = vmatpush1.xpose.msra.mxu0 0.0
        %598 = vmatprep.subr.mxu0 0.0
        %599 = vmatpush1.xpose.msra.mxu0 0.0
        %600 = vmatprep.subr.mxu0 0.0
        %601 = vmatpush1.xpose.msra.mxu0 0.0
        %602 = vmatprep.subr.mxu0 0.0
        %603 = vmatpush1.xpose.msra.mxu0 0.0
        %604 = vmatprep.subr.mxu0 0.0
        %605 = vmatpush1.xpose.msra.mxu0 0.0
        %606 = vmatprep.subr.mxu0 0.0
        %607 = vmatpush1.xpose.msra.mxu0 0.0
        %608 = vmatprep.subr.mxu0 0.0
        %609 = vmatpush1.xpose.msra.mxu0 0.0
        %610 = vmatprep.subr.mxu0 0.0
        %611 = vmatpush1.xpose.msra.mxu0 0.0
        %612 = vmatprep.subr.mxu0 0.0
        %613 = vmatpush1.xpose.msra.mxu0 0.0
        %614 = vmatprep.subr.mxu0 0.0
        %615 = vmatpush1.xpose.msra.mxu0 0.0
        %616 = vmatprep.subr.mxu0 0.0
        %617 = vmatpush1.xpose.msra.mxu0 0.0
        %618 = vmatprep.subr.mxu0 0.0
        %619 = vmatpush1.xpose.msra.mxu0 0.0
        %620 = vmatprep.subr.mxu0 0.0
        %621 = vmatpush1.xpose.msra.mxu0 0.0
        %622 = vmatprep.subr.mxu0 0.0
        %623 = vmatpush1.xpose.msra.mxu0 0.0
        %624 = vmatprep.subr.mxu0 0.0
        %625 = vmatpush1.xpose.msra.mxu0 0.0
        %626 = vmatprep.subr.mxu0 0.0
        %627 = vmatpush1.xpose.msra.mxu0 0.0
        %628 = vmatprep.mubr.f32.mxu0 0.0
        %629 = vmatmul.mubr.f32.gmra.mrb[0].mxu0 %v560
        %v630 = vpop.f32.mrb[0].mxu0
        %v631 = vadd.f32 %v555, %v630
        %v632 = vpop.f32.mrb[0].mxu0
        %633 = vdwg.mxu0
        %s634 = scalar_lea.vmem %s383, 8 [#allocation11]
        %635 = vst.msk [vmem:[%s634] sm:$0xff] %vm389, %v631
        %v636 = vsel %vm389, %v631, -inf
        %637 = vmax.xlane.f32.xlu0 %v636
        %v638 = vpop.xlane.xlu0 %637
        %v639 = vsub.f32 %v631, %v638
        %v640 = vmul.f32 %v639, 1.442695
        %v641 = vpow.pop %v640
        %v642 = vsel %vm389, %v641, 0.0
        %643 = vadd.xlane.f32.xlu0 %v642
        %v644 = vpop.xlane.xlu0 %643
        %v645 = vrcp.pop %v644
        %v646 = vmul.f32 %v644, %v645
        %v647 = vsub.f32 2.0, %v646
        %v648 = vmul.f32 %v645, %v647
        %v649 = vmul.f32 %v641, %v648
        %651 = vrot.lane.b32.xlu0 %v387, 120
        %v652 = vpop.permute.xlu0 %651
        %v655 = vsel %vm389, %v649, 0
        %657 = vmatprep.subr.mxu0 0.0
        %658 = vmatpush1.msra.mxu0 %v652
        %659 = vmatprep.subr.mxu0 0.0
        %660 = vmatpush1.msra.mxu0 0.0
        %661 = vmatprep.subr.mxu0 0.0
        %662 = vmatpush1.msra.mxu0 0.0
        %663 = vmatprep.subr.mxu0 0.0
        %664 = vmatpush1.msra.mxu0 0.0
        %665 = vmatprep.subr.mxu0 0.0
        %666 = vmatpush1.msra.mxu0 0.0
        %667 = vmatprep.subr.mxu0 0.0
        %668 = vmatpush1.msra.mxu0 0.0
        %669 = vmatprep.subr.mxu0 0.0
        %670 = vmatpush1.msra.mxu0 0.0
        %671 = vmatprep.subr.mxu0 0.0
        %672 = vmatpush1.msra.mxu0 0.0
        %673 = vmatprep.subr.mxu0 0.0
        %674 = vmatpush1.msra.mxu0 0.0
        %675 = vmatprep.subr.mxu0 0.0
        %676 = vmatpush1.msra.mxu0 0.0
        %677 = vmatprep.subr.mxu0 0.0
        %678 = vmatpush1.msra.mxu0 0.0
        %679 = vmatprep.subr.mxu0 0.0
        %680 = vmatpush1.msra.mxu0 0.0
        %681 = vmatprep.subr.mxu0 0.0
        %682 = vmatpush1.msra.mxu0 0.0
        %683 = vmatprep.subr.mxu0 0.0
        %684 = vmatpush1.msra.mxu0 0.0
        %685 = vmatprep.subr.mxu0 0.0
        %686 = vmatpush1.msra.mxu0 0.0
        %687 = vmatprep.subr.mxu0 0.0
        %688 = vmatpush1.msra.mxu0 0.0
        %689 = vmatprep.subr.mxu0 0.0
        %690 = vmatpush1.msra.mxu0 0.0
        %691 = vmatprep.subr.mxu0 0.0
        %692 = vmatpush1.msra.mxu0 0.0
        %693 = vmatprep.subr.mxu0 0.0
        %694 = vmatpush1.msra.mxu0 0.0
        %695 = vmatprep.subr.mxu0 0.0
        %696 = vmatpush1.msra.mxu0 0.0
        %697 = vmatprep.subr.mxu0 0.0
        %698 = vmatpush1.msra.mxu0 0.0
        %699 = vmatprep.subr.mxu0 0.0
        %700 = vmatpush1.msra.mxu0 0.0
        %701 = vmatprep.subr.mxu0 0.0
        %702 = vmatpush1.msra.mxu0 0.0
        %703 = vmatprep.subr.mxu0 0.0
        %704 = vmatpush1.msra.mxu0 0.0
        %705 = vmatprep.subr.mxu0 0.0
        %706 = vmatpush1.msra.mxu0 0.0
        %707 = vmatprep.subr.mxu0 0.0
        %708 = vmatpush1.msra.mxu0 0.0
        %709 = vmatprep.subr.mxu0 0.0
        %710 = vmatpush1.msra.mxu0 0.0
        %711 = vmatprep.subr.mxu0 0.0
        %712 = vmatpush1.msra.mxu0 0.0
        %713 = vmatprep.subr.mxu0 0.0
        %714 = vmatpush1.msra.mxu0 0.0
        %715 = vmatprep.subr.mxu0 0.0
        %716 = vmatpush1.msra.mxu0 0.0
        %717 = vmatprep.subr.mxu0 0.0
        %718 = vmatpush1.msra.mxu0 0.0
        %719 = vmatprep.subr.mxu0 0.0
        %720 = vmatpush1.msra.mxu0 0.0
        %721 = vmatprep.mubr.f32.mxu0 0.0
        %722 = vmatmul.mubr.f32.gmra.mrb[0].mxu0 %v655
        %v723 = vpop.f32.mrb[0].mxu0
        %v724 = vadd.f32 0.0, %v723
        %v725 = vpop.f32.mrb[0].mxu0
        %726 = vdwg.mxu0
        %s727 = scalar_lea.vmem %s337, 16 [#allocation8]
        %v728 = vld [vmem:[%s727] sm:$0xff]
        %729 = vrot.lane.b32.xlu0 %v385, 112
        %v730 = vpop.permute.xlu0 %729
        %731 = vrot.lane.b32.xlu0 %v386, 112
        %v732 = vpop.permute.xlu0 %731
        %v733 = vsel %vm389, %v730, 0
        %v735 = vsel %vm389, %v732, 0
        %737 = vmatprep.subr.mxu0 0.0
        %738 = vmatpush1.xpose.msra.mxu0 %v735
        %739 = vmatprep.subr.mxu0 0.0
        %740 = vmatpush1.xpose.msra.mxu0 0.0
        %741 = vmatprep.subr.mxu0 0.0
        %742 = vmatpush1.xpose.msra.mxu0 0.0
        %743 = vmatprep.subr.mxu0 0.0
        %744 = vmatpush1.xpose.msra.mxu0 0.0
        %745 = vmatprep.subr.mxu0 0.0
        %746 = vmatpush1.xpose.msra.mxu0 0.0
        %747 = vmatprep.subr.mxu0 0.0
        %748 = vmatpush1.xpose.msra.mxu0 0.0
        %749 = vmatprep.subr.mxu0 0.0
        %750 = vmatpush1.xpose.msra.mxu0 0.0
        %751 = vmatprep.subr.mxu0 0.0
        %752 = vmatpush1.xpose.msra.mxu0 0.0
        %753 = vmatprep.subr.mxu0 0.0
        %754 = vmatpush1.xpose.msra.mxu0 0.0
        %755 = vmatprep.subr.mxu0 0.0
        %756 = vmatpush1.xpose.msra.mxu0 0.0
        %757 = vmatprep.subr.mxu0 0.0
        %758 = vmatpush1.xpose.msra.mxu0 0.0
        %759 = vmatprep.subr.mxu0 0.0
        %760 = vmatpush1.xpose.msra.mxu0 0.0
        %761 = vmatprep.subr.mxu0 0.0
        %762 = vmatpush1.xpose.msra.mxu0 0.0
        %763 = vmatprep.subr.mxu0 0.0
        %764 = vmatpush1.xpose.msra.mxu0 0.0
        %765 = vmatprep.subr.mxu0 0.0
        %766 = vmatpush1.xpose.msra.mxu0 0.0
        %767 = vmatprep.subr.mxu0 0.0
        %768 = vmatpush1.xpose.msra.mxu0 0.0
        %769 = vmatprep.subr.mxu0 0.0
        %770 = vmatpush1.xpose.msra.mxu0 0.0
        %771 = vmatprep.subr.mxu0 0.0
        %772 = vmatpush1.xpose.msra.mxu0 0.0
        %773 = vmatprep.subr.mxu0 0.0
        %774 = vmatpush1.xpose.msra.mxu0 0.0
        %775 = vmatprep.subr.mxu0 0.0
        %776 = vmatpush1.xpose.msra.mxu0 0.0
        %777 = vmatprep.subr.mxu0 0.0
        %778 = vmatpush1.xpose.msra.mxu0 0.0
        %779 = vmatprep.subr.mxu0 0.0
        %780 = vmatpush1.xpose.msra.mxu0 0.0
        %781 = vmatprep.subr.mxu0 0.0
        %782 = vmatpush1.xpose.msra.mxu0 0.0
        %783 = vmatprep.subr.mxu0 0.0
        %784 = vmatpush1.xpose.msra.mxu0 0.0
        %785 = vmatprep.subr.mxu0 0.0
        %786 = vmatpush1.xpose.msra.mxu0 0.0
        %787 = vmatprep.subr.mxu0 0.0
        %788 = vmatpush1.xpose.msra.mxu0 0.0
        %789 = vmatprep.subr.mxu0 0.0
        %790 = vmatpush1.xpose.msra.mxu0 0.0
        %791 = vmatprep.subr.mxu0 0.0
        %792 = vmatpush1.xpose.msra.mxu0 0.0
        %793 = vmatprep.subr.mxu0 0.0
        %794 = vmatpush1.xpose.msra.mxu0 0.0
        %795 = vmatprep.subr.mxu0 0.0
        %796 = vmatpush1.xpose.msra.mxu0 0.0
        %797 = vmatprep.subr.mxu0 0.0
        %798 = vmatpush1.xpose.msra.mxu0 0.0
        %799 = vmatprep.subr.mxu0 0.0
        %800 = vmatpush1.xpose.msra.mxu0 0.0
        %801 = vmatprep.mubr.f32.mxu0 0.0
        %802 = vmatmul.mubr.f32.gmra.mrb[0].mxu0 %v733
        %v803 = vpop.f32.mrb[0].mxu0
        %v804 = vadd.f32 %v728, %v803
        %v805 = vpop.f32.mrb[0].mxu0
        %806 = vdwg.mxu0
        %s807 = scalar_lea.vmem %s383, 16 [#allocation11]
        %808 = vst.msk [vmem:[%s807] sm:$0xff] %vm389, %v804
        %v809 = vsel %vm389, %v804, -inf
        %810 = vmax.xlane.f32.xlu0 %v809
        %v811 = vpop.xlane.xlu0 %810
        %v812 = vsub.f32 %v804, %v811
        %v813 = vmul.f32 %v812, 1.442695
        %v814 = vpow.pop %v813
        %v815 = vsel %vm389, %v814, 0.0
        %816 = vadd.xlane.f32.xlu0 %v815
        %v817 = vpop.xlane.xlu0 %816
        %v818 = vrcp.pop %v817
        %v819 = vmul.f32 %v817, %v818
        %v820 = vsub.f32 2.0, %v819
        %v821 = vmul.f32 %v818, %v820
        %v822 = vmul.f32 %v814, %v821
        %823 = vrot.lane.b32.xlu0 %v387, 112
        %v824 = vpop.permute.xlu0 %823
        %v827 = vsel %vm389, %v822, 0
        %829 = vmatprep.subr.mxu0 0.0
        %830 = vmatpush1.msra.mxu0 %v824
        %831 = vmatprep.subr.mxu0 0.0
        %832 = vmatpush1.msra.mxu0 0.0
        %833 = vmatprep.subr.mxu0 0.0
        %834 = vmatpush1.msra.mxu0 0.0
        %835 = vmatprep.subr.mxu0 0.0
        %836 = vmatpush1.msra.mxu0 0.0
        %837 = vmatprep.subr.mxu0 0.0
        %838 = vmatpush1.msra.mxu0 0.0
        %839 = vmatprep.subr.mxu0 0.0
        %840 = vmatpush1.msra.mxu0 0.0
        %841 = vmatprep.subr.mxu0 0.0
        %842 = vmatpush1.msra.mxu0 0.0
        %843 = vmatprep.subr.mxu0 0.0
        %844 = vmatpush1.msra.mxu0 0.0
        %845 = vmatprep.subr.mxu0 0.0
        %846 = vmatpush1.msra.mxu0 0.0
        %847 = vmatprep.subr.mxu0 0.0
        %848 = vmatpush1.msra.mxu0 0.0
        %849 = vmatprep.subr.mxu0 0.0
        %850 = vmatpush1.msra.mxu0 0.0
        %851 = vmatprep.subr.mxu0 0.0
        %852 = vmatpush1.msra.mxu0 0.0
        %853 = vmatprep.subr.mxu0 0.0
        %854 = vmatpush1.msra.mxu0 0.0
        %855 = vmatprep.subr.mxu0 0.0
        %856 = vmatpush1.msra.mxu0 0.0
        %857 = vmatprep.subr.mxu0 0.0
        %858 = vmatpush1.msra.mxu0 0.0
        %859 = vmatprep.subr.mxu0 0.0
        %860 = vmatpush1.msra.mxu0 0.0
        %861 = vmatprep.subr.mxu0 0.0
        %862 = vmatpush1.msra.mxu0 0.0
        %863 = vmatprep.subr.mxu0 0.0
        %864 = vmatpush1.msra.mxu0 0.0
        %865 = vmatprep.subr.mxu0 0.0
        %866 = vmatpush1.msra.mxu0 0.0
        %867 = vmatprep.subr.mxu0 0.0
        %868 = vmatpush1.msra.mxu0 0.0
        %869 = vmatprep.subr.mxu0 0.0
        %870 = vmatpush1.msra.mxu0 0.0
        %871 = vmatprep.subr.mxu0 0.0
        %872 = vmatpush1.msra.mxu0 0.0
        %873 = vmatprep.subr.mxu0 0.0
        %874 = vmatpush1.msra.mxu0 0.0
        %875 = vmatprep.subr.mxu0 0.0
        %876 = vmatpush1.msra.mxu0 0.0
        %877 = vmatprep.subr.mxu0 0.0
        %878 = vmatpush1.msra.mxu0 0.0
        %879 = vmatprep.subr.mxu0 0.0
        %880 = vmatpush1.msra.mxu0 0.0
        %881 = vmatprep.subr.mxu0 0.0
        %882 = vmatpush1.msra.mxu0 0.0
        %883 = vmatprep.subr.mxu0 0.0
        %884 = vmatpush1.msra.mxu0 0.0
        %885 = vmatprep.subr.mxu0 0.0
        %886 = vmatpush1.msra.mxu0 0.0
        %887 = vmatprep.subr.mxu0 0.0
        %888 = vmatpush1.msra.mxu0 0.0
        %889 = vmatprep.subr.mxu0 0.0
        %890 = vmatpush1.msra.mxu0 0.0
        %891 = vmatprep.subr.mxu0 0.0
        %892 = vmatpush1.msra.mxu0 0.0
        %893 = vmatprep.mubr.f32.mxu0 0.0
        %894 = vmatmul.mubr.f32.gmra.mrb[0].mxu0 %v827
        %v895 = vpop.f32.mrb[0].mxu0
        %v896 = vadd.f32 0.0, %v895
        %v897 = vpop.f32.mrb[0].mxu0
        %898 = vdwg.mxu0
        %s899 = scalar_lea.vmem %s337, 24 [#allocation8]
        %v900 = vld [vmem:[%s899] sm:$0xff]
        %901 = vrot.lane.b32.xlu0 %v385, 104
        %v902 = vpop.permute.xlu0 %901
        %903 = vrot.lane.b32.xlu0 %v386, 104
        %v904 = vpop.permute.xlu0 %903
        %v905 = vsel %vm389, %v902, 0
        %v907 = vsel %vm389, %v904, 0
        %909 = vmatprep.subr.mxu0 0.0
        %910 = vmatpush1.xpose.msra.mxu0 %v907
        %911 = vmatprep.subr.mxu0 0.0
        %912 = vmatpush1.xpose.msra.mxu0 0.0
        %913 = vmatprep.subr.mxu0 0.0
        %914 = vmatpush1.xpose.msra.mxu0 0.0
        %915 = vmatprep.subr.mxu0 0.0
        %916 = vmatpush1.xpose.msra.mxu0 0.0
        %917 = vmatprep.subr.mxu0 0.0
        %918 = vmatpush1.xpose.msra.mxu0 0.0
        %919 = vmatprep.subr.mxu0 0.0
        %920 = vmatpush1.xpose.msra.mxu0 0.0
        %921 = vmatprep.subr.mxu0 0.0
        %922 = vmatpush1.xpose.msra.mxu0 0.0
        %923 = vmatprep.subr.mxu0 0.0
        %924 = vmatpush1.xpose.msra.mxu0 0.0
        %925 = vmatprep.subr.mxu0 0.0
        %926 = vmatpush1.xpose.msra.mxu0 0.0
        %927 = vmatprep.subr.mxu0 0.0
        %928 = vmatpush1.xpose.msra.mxu0 0.0
        %929 = vmatprep.subr.mxu0 0.0
        %930 = vmatpush1.xpose.msra.mxu0 0.0
        %931 = vmatprep.subr.mxu0 0.0
        %932 = vmatpush1.xpose.msra.mxu0 0.0
        %933 = vmatprep.subr.mxu0 0.0
        %934 = vmatpush1.xpose.msra.mxu0 0.0
        %935 = vmatprep.subr.mxu0 0.0
        %936 = vmatpush1.xpose.msra.mxu0 0.0
        %937 = vmatprep.subr.mxu0 0.0
        %938 = vmatpush1.xpose.msra.mxu0 0.0
        %939 = vmatprep.subr.mxu0 0.0
        %940 = vmatpush1.xpose.msra.mxu0 0.0
        %941 = vmatprep.subr.mxu0 0.0
        %942 = vmatpush1.xpose.msra.mxu0 0.0
        %943 = vmatprep.subr.mxu0 0.0
        %944 = vmatpush1.xpose.msra.mxu0 0.0
        %945 = vmatprep.subr.mxu0 0.0
        %946 = vmatpush1.xpose.msra.mxu0 0.0
        %947 = vmatprep.subr.mxu0 0.0
        %948 = vmatpush1.xpose.msra.mxu0 0.0
        %949 = vmatprep.subr.mxu0 0.0
        %950 = vmatpush1.xpose.msra.mxu0 0.0
        %951 = vmatprep.subr.mxu0 0.0
        %952 = vmatpush1.xpose.msra.mxu0 0.0
        %953 = vmatprep.subr.mxu0 0.0
        %954 = vmatpush1.xpose.msra.mxu0 0.0
        %955 = vmatprep.subr.mxu0 0.0
        %956 = vmatpush1.xpose.msra.mxu0 0.0
        %957 = vmatprep.subr.mxu0 0.0
        %958 = vmatpush1.xpose.msra.mxu0 0.0
        %959 = vmatprep.subr.mxu0 0.0
        %960 = vmatpush1.xpose.msra.mxu0 0.0
        %961 = vmatprep.subr.mxu0 0.0
        %962 = vmatpush1.xpose.msra.mxu0 0.0
        %963 = vmatprep.subr.mxu0 0.0
        %964 = vmatpush1.xpose.msra.mxu0 0.0
        %965 = vmatprep.subr.mxu0 0.0
        %966 = vmatpush1.xpose.msra.mxu0 0.0
        %967 = vmatprep.subr.mxu0 0.0
        %968 = vmatpush1.xpose.msra.mxu0 0.0
        %969 = vmatprep.subr.mxu0 0.0
        %970 = vmatpush1.xpose.msra.mxu0 0.0
        %971 = vmatprep.subr.mxu0 0.0
        %972 = vmatpush1.xpose.msra.mxu0 0.0
        %973 = vmatprep.mubr.f32.mxu0 0.0
        %974 = vmatmul.mubr.f32.gmra.mrb[0].mxu0 %v905
        %v975 = vpop.f32.mrb[0].mxu0
        %v976 = vadd.f32 %v900, %v975
        %v977 = vpop.f32.mrb[0].mxu0
        %978 = vdwg.mxu0
        %s979 = scalar_lea.vmem %s383, 24 [#allocation11]
        %980 = vst.msk [vmem:[%s979] sm:$0xff] %vm389, %v976
        %v981 = vsel %vm389, %v976, -inf
        %982 = vmax.xlane.f32.xlu0 %v981
        %v983 = vpop.xlane.xlu0 %982
        %v984 = vsub.f32 %v976, %v983
        %v985 = vmul.f32 %v984, 1.442695
        %v986 = vpow.pop %v985
        %v987 = vsel %vm389, %v986, 0.0
        %988 = vadd.xlane.f32.xlu0 %v987
        %v989 = vpop.xlane.xlu0 %988
        %v990 = vrcp.pop %v989
        %v991 = vmul.f32 %v989, %v990
        %v992 = vsub.f32 2.0, %v991
        %v993 = vmul.f32 %v990, %v992
        %v994 = vmul.f32 %v986, %v993
        %995 = vrot.lane.b32.xlu0 %v387, 104
        %v996 = vpop.permute.xlu0 %995
        %v999 = vsel %vm389, %v994, 0
        %1001 = vmatprep.subr.mxu0 0.0
        %1002 = vmatpush1.msra.mxu0 %v996
        %1003 = vmatprep.subr.mxu0 0.0
        %1004 = vmatpush1.msra.mxu0 0.0
        %1005 = vmatprep.subr.mxu0 0.0
        %1006 = vmatpush1.msra.mxu0 0.0
        %1007 = vmatprep.subr.mxu0 0.0
        %1008 = vmatpush1.msra.mxu0 0.0
        %1009 = vmatprep.subr.mxu0 0.0
        %1010 = vmatpush1.msra.mxu0 0.0
        %1011 = vmatprep.subr.mxu0 0.0
        %1012 = vmatpush1.msra.mxu0 0.0
        %1013 = vmatprep.subr.mxu0 0.0
        %1014 = vmatpush1.msra.mxu0 0.0
        %1015 = vmatprep.subr.mxu0 0.0
        %1016 = vmatpush1.msra.mxu0 0.0
        %1017 = vmatprep.subr.mxu0 0.0
        %1018 = vmatpush1.msra.mxu0 0.0
        %1019 = vmatprep.subr.mxu0 0.0
        %1020 = vmatpush1.msra.mxu0 0.0
        %1021 = vmatprep.subr.mxu0 0.0
        %1022 = vmatpush1.msra.mxu0 0.0
        %1023 = vmatprep.subr.mxu0 0.0
        %1024 = vmatpush1.msra.mxu0 0.0
        %1025 = vmatprep.subr.mxu0 0.0
        %1026 = vmatpush1.msra.mxu0 0.0
        %1027 = vmatprep.subr.mxu0 0.0
        %1028 = vmatpush1.msra.mxu0 0.0
        %1029 = vmatprep.subr.mxu0 0.0
        %1030 = vmatpush1.msra.mxu0 0.0
        %1031 = vmatprep.subr.mxu0 0.0
        %1032 = vmatpush1.msra.mxu0 0.0
        %1033 = vmatprep.subr.mxu0 0.0
        %1034 = vmatpush1.msra.mxu0 0.0
        %1035 = vmatprep.subr.mxu0 0.0
        %1036 = vmatpush1.msra.mxu0 0.0
        %1037 = vmatprep.subr.mxu0 0.0
        %1038 = vmatpush1.msra.mxu0 0.0
        %1039 = vmatprep.subr.mxu0 0.0
        %1040 = vmatpush1.msra.mxu0 0.0
        %1041 = vmatprep.subr.mxu0 0.0
        %1042 = vmatpush1.msra.mxu0 0.0
        %1043 = vmatprep.subr.mxu0 0.0
        %1044 = vmatpush1.msra.mxu0 0.0
        %1045 = vmatprep.subr.mxu0 0.0
        %1046 = vmatpush1.msra.mxu0 0.0
        %1047 = vmatprep.subr.mxu0 0.0
        %1048 = vmatpush1.msra.mxu0 0.0
        %1049 = vmatprep.subr.mxu0 0.0
        %1050 = vmatpush1.msra.mxu0 0.0
        %1051 = vmatprep.subr.mxu0 0.0
        %1052 = vmatpush1.msra.mxu0 0.0
        %1053 = vmatprep.subr.mxu0 0.0
        %1054 = vmatpush1.msra.mxu0 0.0
        %1055 = vmatprep.subr.mxu0 0.0
        %1056 = vmatpush1.msra.mxu0 0.0
        %1057 = vmatprep.subr.mxu0 0.0
        %1058 = vmatpush1.msra.mxu0 0.0
        %1059 = vmatprep.subr.mxu0 0.0
        %1060 = vmatpush1.msra.mxu0 0.0
        %1061 = vmatprep.subr.mxu0 0.0
        %1062 = vmatpush1.msra.mxu0 0.0
        %1063 = vmatprep.subr.mxu0 0.0
        %1064 = vmatpush1.msra.mxu0 0.0
        %1065 = vmatprep.mubr.f32.mxu0 0.0
        %1066 = vmatmul.mubr.f32.gmra.mrb[0].mxu0 %v999
        %v1067 = vpop.f32.mrb[0].mxu0
        %v1068 = vadd.f32 0.0, %v1067
        %v1069 = vpop.f32.mrb[0].mxu0
        %1070 = vdwg.mxu0
        %1072 = vrot.lane.b32.xlu0 %v724, 8
        %v1073 = vpop.permute.xlu0 %1072
        %1076 = vrot.lane.b32.xlu0 %v896, 16
        %v1077 = vpop.permute.xlu0 %1076
        %1080 = vrot.lane.b32.xlu0 %v1068, 24
        %v1081 = vpop.permute.xlu0 %1080
        %v1083 = vsel %vm389, %v551, %v1073
        %vm1084 = vcmask 130048
        %v1085 = vsel %vm1084, %v1083, %v1077
        %vm1086 = vcmask 195584
        %v1087 = vsel %vm1086, %v1085, %v1081
        %vm1088 = vcmask 261120
        %1089 = vst.msk [vmem:[%s376] sm:$0xff] %vm1088, %v1087
        %s1090 = sand.u32 %s162, 1
        %s1091 = scalar_lea.sflag [#allocation4], %s1090
        %s1092 = sand.u32 %s162, 1
        %s1093 = smul.addr %s1092, 8
        %s1094 = scalar_lea.vmem [#allocation10], %s1093
        %s1095 = sand.u32 %s190, 1
        %s1096 = scalar_lea.sflag [#allocation12], %s1095
        %s1097 = sand.u32 %s190, 1
        %s1098 = smul.addr %s1097, 32
        %s1099 = scalar_lea.vmem [#allocation11], %s1098
        // Predicated region
        $region53: #{tpu_custom_call.1} parent=35 // pred_check
          %p1100 = pneg %p172
        $region54: #{tpu_custom_call.1} parent=35 // pred_check_branch
          %1102 = sbr.rel (%p1100) target = $region56
        $region55: #{tpu_custom_call.1} parent=35 // pred_region
          %s1104 = ssub.s32 128, 128
          %1105 = vsyncadd %s1091, %s1104
          %s1106 = sadd.s32 %s37, %s36
          %s1107 = smul.addr %s1106, 128
          %s1108 = scalar_lea.hbm %s4, %s1107
          %s1110 = sshll.u32 %s1094, 4
          %s1111 = int_to_ptr.vmem [resolvable:$true] %s1110
          %1113 = dma.vmem_to_hbm [thread:$0]  %s1111, 128, %s1108, %s1091
        $region56: #{tpu_custom_call.1} parent=35 // pred_fallthru
          _
        // Predicated region
        $region57: #{tpu_custom_call.1} parent=35 // pred_check
          %p1114 = pneg %p200
        $region58: #{tpu_custom_call.1} parent=35 // pred_check_branch
          %1116 = sbr.rel (%p1114) target = $region60
        $region59: #{tpu_custom_call.1} parent=35 // pred_region
          %s1118 = ssub.s32 512, 512
          %1119 = vsyncadd %s1096, %s1118
          %s1120 = smul.addr %s36, 4
          %s1121 = sadd.s32 %s37, %s1120
          %s1122 = smul.addr %s1121, 128
          %s1123 = scalar_lea.hbm %s5, %s1122
          %s1124 = sshll.u32 %s1099, 4
          %s1125 = int_to_ptr.vmem [resolvable:$true] %s1124
          %1130 = dma.vmem_to_hbm [thread:$0]  %s1125, 512, %s1123, %s1096, 128, 128, 8
        $region60: #{tpu_custom_call.1} parent=35 // pred_fallthru
          _
      $region36: #{tpu_custom_call.1} parent=5 // pred_fallthru
        _
      %p1131 = scmp.le.s32.totalorder 2, %s27
      // Predicated region
      $region61: #{tpu_custom_call.1} parent=5 // pred_check
        %p1132 = pneg %p1131
      $region62: #{tpu_custom_call.1} parent=5 // pred_check_branch
        %1134 = sbr.rel (%p1132) target = $region64
      $region63: #{tpu_custom_call.1} parent=5 // pred_region
        %s1135 = ssub.s32 %s27, 2
        // Predicated region
        $region65: #{tpu_custom_call.1} parent=63 // pred_check
          %p1136 = pneg %p178
        $region66: #{tpu_custom_call.1} parent=63 // pred_check_branch
          %1138 = sbr.rel (%p1136) target = $region68
        $region67: #{tpu_custom_call.1} parent=63 // pred_region
          %s1139 = sand.u32 %s163, 1
          %s1140 = scalar_lea.sflag [#allocation4], %s1139
          %s1141 = sand.u32 %s163, 1
          %s1142 = smul.addr %s1141, 8
          %s1143 = scalar_lea.vmem [#allocation10], %s1142
          %1144 = dma.done %s1140, 128
        $region68: #{tpu_custom_call.1} parent=63 // pred_fallthru
          _
        // Predicated region
        $region69: #{tpu_custom_call.1} parent=63 // pred_check
          %p1145 = pneg %p206
        $region70: #{tpu_custom_call.1} parent=63 // pred_check_branch
          %1147 = sbr.rel (%p1145) target = $region72
        $region71: #{tpu_custom_call.1} parent=63 // pred_region
          %s1148 = sand.u32 %s191, 1
          %s1149 = scalar_lea.sflag [#allocation12], %s1148
          %s1150 = sand.u32 %s191, 1
          %s1151 = smul.addr %s1150, 32
          %s1152 = scalar_lea.vmem [#allocation11], %s1151
          %1153 = dma.done %s1149, 512
        $region72: #{tpu_custom_call.1} parent=63 // pred_fallthru
          _
      $region64: #{tpu_custom_call.1} parent=5 // pred_fallthru
        _
    $region6: #{tpu_custom_call.1} parent=1 // loop_footer
      %s31 = sadd.s32 1, %s27
    $region7: #{tpu_custom_call.1} parent=1 // loop_footer_branch
      %26 = sbr.rel target = $region3
    $region8: #{tpu_custom_call.1} parent=1 // loop_exit
      _
    %1154 = vsyncpa [#allocation3], 1
    %s1155 = scalar_lea.sflag [#allocation3], 1
    %1156 = vsyncpa %s1155, 1
    %1157 = vsyncpa [#allocation6], 1
    %s1158 = scalar_lea.sflag [#allocation6], 1
    %1159 = vsyncpa %s1158, 1
    %1160 = vsyncpa [#allocation9], 1
    %s1161 = scalar_lea.sflag [#allocation9], 1
    %1162 = vsyncpa %s1161, 1
    %1163 = vsyncpa [#allocation4], 1
    %s1164 = scalar_lea.sflag [#allocation4], 1
    %1165 = vsyncpa %s1164, 1
    %1166 = vsyncpa [#allocation12], 1
    %s1167 = scalar_lea.sflag [#allocation12], 1
    %1168 = vsyncpa %s1167, 1

</llo_original>
